<compile_context>
chip_gen: v6e
topology: v6e:2x2x1
jax: 0.10.0
libtpu: 0.0.40
codegen_flags: <defaults>
</compile_context>

<pallas_src>
import jax
import jax.numpy as jnp
from jax.experimental import pallas as pl
from jax.experimental.pallas import tpu as pltpu

# ---------------- model config (small, consistent with the module) ----------
B = 2            # batch
N_FEATURES = 4   # conv in_channels
WINDOW = 16      # time window (H)
N_ASSETS = 8     # assets (W of the image, also conv kernel width)
KH = 5           # conv kernel height
C_OUT = 32       # conv out_channels
T_OUT = WINDOW - KH + 1                  # 12
K_COL = N_FEATURES * KH * N_ASSETS       # 160  (true conv contraction dim)
CNN_OUT = C_OUT * T_OUT                  # 384  (after Flatten)
MLP_IN = CNN_OUT + N_ASSETS              # 392
H1, H2 = 256, 128

K_IN = N_FEATURES * WINDOW * N_ASSETS    # 512  (flattened NCHW image)
LANE = 128                               # lane-dense output width
TILE_M = 128                             # batch tile for the grid (review: >=128)
BIAS_W = CNN_OUT + H1 + H2 + LANE        # 896 = 7*128 (packed bias row)


# ---------------- fused Pallas kernel ----------------------------------------
def actor_fused_kernel(x_ref, cw_ref, wbig_ref, w1c_ref, w1w_ref, w2_ref,
                       w3_ref, bias_ref, out_ref):
    f32 = jnp.float32
    bf16 = jnp.bfloat16

    # Static, lane-aligned slices of the packed bias row (zero runtime cost).
    bc = bias_ref[:, 0:CNN_OUT]                           # (1, 384)
    b1 = bias_ref[:, CNN_OUT:CNN_OUT + H1]                # (1, 256)
    b2 = bias_ref[:, CNN_OUT + H1:CNN_OUT + H1 + H2]      # (1, 128)
    b3 = bias_ref[:, CNN_OUT + H1 + H2:BIAS_W]            # (1, 128)

    # Conv2d + bias + ReLU as one matmul against the Toeplitz-folded conv weight.
    # x: [tm, 512] bf16, wbig: [512, 384] bf16  ->  conv: [tm, 384] f32
    conv = jnp.dot(x_ref[...], wbig_ref[...], preferred_element_type=f32)
    conv = jnp.maximum(conv + bc, 0.0).astype(bf16)

    # Linear(392, 256) with the flatten-permutation and the concat folded into
    # the weight layout:  h1 = relu(conv_flat @ w1_cnn + current_w @ w1_w + b1)
    h = (jnp.dot(conv, w1c_ref[...], preferred_element_type=f32)
         + jnp.dot(cw_ref[...], w1w_ref[...], preferred_element_type=f32)
         + b1)
    h = jnp.maximum(h, 0.0).astype(bf16)
    # Dropout(p=0.1) is identity in eval/inference mode.
    # TODO(synk): training-mode stochastic dropout (pltpu.prng_*) not implemented.

    # Linear(256, 128) + ReLU
    h = jnp.dot(h, w2_ref[...], preferred_element_type=f32) + b2
    h = jnp.maximum(h, 0.0).astype(bf16)

    # Linear(128, n_assets) padded to 128 output lanes, then stable softplus (f32).
    z = jnp.dot(h, w3_ref[...], preferred_element_type=f32) + b3
    sp = jnp.maximum(z, 0.0) + jnp.log1p(jnp.exp(-jnp.abs(z)))
    out_ref[...] = sp + 1e-6              # lane-dense (tm, 128) f32 store


# ---------------- forward pass ------------------------------------------------
def _round_up(x, m):
    return (x + m - 1) // m * m


@jax.jit
def actor_cnn_forward(params, market_image, current_weights):
    b = market_image.shape[0]
    bf16 = jnp.bfloat16

    # Free reshape of the NCHW image (no transpose / im2col / host padding).
    x = market_image.reshape(b, K_IN).astype(bf16)
    cw = current_weights.astype(bf16)                     # (b, 8), no pad

    if b >= TILE_M:
        tile_m = TILE_M
        b_pad = _round_up(b, tile_m)
        if b_pad != b:                                    # pad only if needed
            x = jnp.pad(x, ((0, b_pad - b), (0, 0)))
            cw = jnp.pad(cw, ((0, b_pad - b), (0, 0)))
    else:
        tile_m = b            # block == full array dims: legal, no host padding
        b_pad = b
    n_tiles = b_pad // tile_m

    # Weights: constant index_map -> DMA'd once, VMEM-resident across the grid.
    def const(shape):
        return pl.BlockSpec(shape, lambda i: (0, 0))

    mac = (K_IN * CNN_OUT + CNN_OUT * H1 + N_ASSETS * H1 + H1 * H2 + H2 * LANE)
    weight_bytes = 2 * mac + 4 * BIAS_W                   # bf16 weights + f32 biases
    cost = pl.CostEstimate(
        flops=2 * b_pad * mac,
        transcendentals=2 * b_pad * LANE,                 # exp + log1p per lane
        bytes_accessed=weight_bytes + 2 * b_pad * (K_IN + N_ASSETS)
                       + 4 * b_pad * LANE)

    out = pl.pallas_call(
        actor_fused_kernel,
        out_shape=jax.ShapeDtypeStruct((b_pad, LANE), jnp.float32),
        grid=(n_tiles,),
        in_specs=[
            pl.BlockSpec((tile_m, K_IN), lambda i: (i, 0)),      # x tile
            pl.BlockSpec((tile_m, N_ASSETS), lambda i: (i, 0)),  # current_weights tile
            const((K_IN, CNN_OUT)),                              # w_big
            const((CNN_OUT, H1)),                                # w1_cnn
            const((N_ASSETS, H1)),                               # w1_w
            const((H1, H2)),                                     # w2
            const((H2, LANE)),                                   # w3p
            const((1, BIAS_W)),                                  # packed biases
        ],
        out_specs=pl.BlockSpec((tile_m, LANE), lambda i: (i, 0)),
        compiler_params=pltpu.CompilerParams(
            dimension_semantics=("parallel",)),                  # v7x: 2 TCs split batch
        cost_estimate=cost,
    )(x, cw,
      params["w_big"], params["w1_cnn"], params["w1_w"],
      params["w2"], params["w3p"], params["bias"])

    # forward() returns Dirichlet(alphas); we return the concentration params.
    return out[:b, :N_ASSETS]


# ---------------- pure-JAX f32 reference (sanity check) -----------------------
def reference_forward(params, market_image, current_weights):
    conv = jax.lax.conv_general_dilated(
        market_image, params["wc_oihw"], window_strides=(1, 1), padding="VALID",
        dimension_numbers=("NCHW", "OIHW", "NCHW"))
    conv = jnp.maximum(conv + params["bc"].reshape(1, C_OUT, 1, 1), 0.0)
    cnn_out = conv.reshape(market_image.shape[0], -1)
    x = jnp.concatenate([cnn_out, current_weights], axis=1)
    h = jnp.maximum(x @ params["w1"] + params["b1_v"], 0.0)
    h = jnp.maximum(h @ params["w2_f32"] + params["b2_v"], 0.0)
    z = h @ params["w3_f32"] + params["b3_v"]
    return jax.nn.softplus(z) + 1e-6


# ---------------- deterministic parameter init --------------------------------
def init_params(key):
    ks = jax.random.split(key, 8)

    def uni(k, shape, fan_in):
        bound = 1.0 / jnp.sqrt(jnp.float32(fan_in))
        return jax.random.uniform(k, shape, jnp.float32, -bound, bound)

    wc_oihw = uni(ks[0], (C_OUT, N_FEATURES, KH, N_ASSETS), K_COL)
    bc = uni(ks[1], (C_OUT,), K_COL)
    w1 = uni(ks[2], (MLP_IN, H1), MLP_IN)
    b1 = uni(ks[3], (H1,), MLP_IN)
    w2 = uni(ks[4], (H1, H2), H1)
    b2 = uni(ks[5], (H2,), H1)
    w3 = uni(ks[6], (H2, N_ASSETS), H2)
    b3 = uni(ks[7], (N_ASSETS,), H2)

    # --- Toeplitz / im2col-folded conv weight: [C*W*A, T_OUT*C_OUT] -----------
    # w_big[c*W*A + w*A + a, t*C_OUT + o] = wc[o, c, w - t, a]  for 0 <= w-t < KH
    wc_cdao = wc_oihw.transpose(1, 2, 3, 0)                     # [c, dh, a, o]
    wb = jnp.zeros((N_FEATURES, WINDOW, N_ASSETS, T_OUT, C_OUT), jnp.float32)
    for t in range(T_OUT):
        wb = wb.at[:, t:t + KH, :, t, :].set(wc_cdao)
    w_big = wb.reshape(K_IN, CNN_OUT)
    bc_row = jnp.tile(bc, (T_OUT,)).reshape(1, CNN_OUT)         # bc_row[0, t*32+o]=bc[o]

    # --- fold PyTorch channel-major Flatten permutation into w1; split off the
    #     current_weights rows (unpadded, shape (8, 256)) -----------------------
    # kernel conv output lane j = t*C_OUT + o  <->  PyTorch flatten row o*T_OUT + t
    w1_cnn = (w1[:CNN_OUT].reshape(C_OUT, T_OUT, H1)
              .transpose(1, 0, 2).reshape(CNN_OUT, H1))
    w1_w = w1[CNN_OUT:]                                         # (8, 256)

    # --- pad final layer to 128 output lanes (lane-dense store) ----------------
    w3p = jnp.zeros((H2, LANE), jnp.float32).at[:, :N_ASSETS].set(w3)
    b3p = jnp.zeros((1, LANE), jnp.float32).at[0, :N_ASSETS].set(b3)

    # --- pack all f32 bias rows into one lane-aligned [1, 896] array -----------
    bias = jnp.concatenate(
        [bc_row, b1.reshape(1, H1), b2.reshape(1, H2), b3p], axis=1)

    bf16 = jnp.bfloat16
    return {
        # f32 originals for the pure-JAX reference
        "wc_oihw": wc_oihw, "bc": bc,
        "w1": w1, "b1_v": b1, "w2_f32": w2, "b2_v": b2, "w3_f32": w3, "b3_v": b3,
        # kernel params (bf16 matmul weights, packed f32 biases)
        "w_big": w_big.astype(bf16),
        "w1_cnn": w1_cnn.astype(bf16),
        "w1_w": w1_w.astype(bf16),
        "w2": w2.astype(bf16),
        "w3p": w3p.astype(bf16),
        "bias": bias,
    }


if __name__ == "__main__":
    key = jax.random.PRNGKey(0)
    kp, kx, kw, kx2, kw2 = jax.random.split(key, 5)

    params = init_params(kp)

    # --- small batch (B=2), consistent with the module ------------------------
    market_image = jax.random.normal(kx, (B, N_FEATURES, WINDOW, N_ASSETS), jnp.float32)
    raw_w = jax.random.uniform(kw, (B, N_ASSETS), jnp.float32)
    current_weights = raw_w / jnp.sum(raw_w, axis=1, keepdims=True)

    alphas = jax.block_until_ready(
        actor_cnn_forward(params, market_image, current_weights))
    ref = reference_forward(params, market_image, current_weights)
    assert alphas.shape == (B, N_ASSETS)
    assert jnp.all(alphas > 0.0)
    # bf16 weights/activations vs f32 reference -> loose tolerance
    assert jnp.allclose(alphas, ref, rtol=5e-2, atol=5e-2), (
        f"max abs err {jnp.max(jnp.abs(alphas - ref))}")

    # --- larger batch exercising the multi-tile grid (weights stay resident) ---
    BIG = 256
    mi_big = jax.random.normal(kx2, (BIG, N_FEATURES, WINDOW, N_ASSETS), jnp.float32)
    rw_big = jax.random.uniform(kw2, (BIG, N_ASSETS), jnp.float32)
    cw_big = rw_big / jnp.sum(rw_big, axis=1, keepdims=True)

    alphas_big = jax.block_until_ready(actor_cnn_forward(params, mi_big, cw_big))
    ref_big = reference_forward(params, mi_big, cw_big)
    assert alphas_big.shape == (BIG, N_ASSETS)
    assert jnp.all(alphas_big > 0.0)
    assert jnp.allclose(alphas_big, ref_big, rtol=5e-2, atol=5e-2), (
        f"max abs err {jnp.max(jnp.abs(alphas_big - ref_big))}")

    print("KERNEL_OK")
</pallas_src>

<mosaic_0001>
module attributes {stable_mosaic.version = 11 : i64} {
  func.func @actor_fused_kernel(%arg0: i32, %arg1: memref<2x512xbf16, #tpu.memory_space<vmem>>, %arg2: memref<2x8xbf16, #tpu.memory_space<vmem>>, %arg3: memref<512x384xbf16, #tpu.memory_space<vmem>>, %arg4: memref<384x256xbf16, #tpu.memory_space<vmem>>, %arg5: memref<8x256xbf16, #tpu.memory_space<vmem>>, %arg6: memref<256x128xbf16, #tpu.memory_space<vmem>>, %arg7: memref<128x128xbf16, #tpu.memory_space<vmem>>, %arg8: memref<1x896xf32, #tpu.memory_space<vmem>>, %arg9: memref<2x128xf32, #tpu.memory_space<vmem>>) attributes {dimension_semantics = [#tpu.dimension_semantics<parallel>], iteration_bounds = array<i64: 1>, scalar_prefetch = 0 : i64, scratch_operands = 0 : i64, tpu.core_type = #tpu.core_type<tc>, window_params = [{transform_indices = @transform_0, window_bounds = array<i64: 2, 512>}, {transform_indices = @transform_1, window_bounds = array<i64: 2, 8>}, {pipeline_mode = #tpu.pipeline_mode<synchronous>, transform_indices = @transform_2, window_bounds = array<i64: 512, 384>}, {pipeline_mode = #tpu.pipeline_mode<synchronous>, transform_indices = @transform_3, window_bounds = array<i64: 384, 256>}, {pipeline_mode = #tpu.pipeline_mode<synchronous>, transform_indices = @transform_4, window_bounds = array<i64: 8, 256>}, {pipeline_mode = #tpu.pipeline_mode<synchronous>, transform_indices = @transform_5, window_bounds = array<i64: 256, 128>}, {pipeline_mode = #tpu.pipeline_mode<synchronous>, transform_indices = @transform_6, window_bounds = array<i64: 128, 128>}, {pipeline_mode = #tpu.pipeline_mode<synchronous>, transform_indices = @transform_7, window_bounds = array<i64: 1, 896>}, {transform_indices = @transform_8, window_bounds = array<i64: 2, 128>}]} {
    %c0 = arith.constant 0 : index
    %c0_0 = arith.constant 0 : index
    %0 = vector.load %arg8[%c0, %c0_0] : memref<1x896xf32, #tpu.memory_space<vmem>>, vector<1x384xf32>
    %c0_1 = arith.constant 0 : index
    %c384 = arith.constant 384 : index
    %1 = vector.load %arg8[%c0_1, %c384] : memref<1x896xf32, #tpu.memory_space<vmem>>, vector<1x256xf32>
    %c0_2 = arith.constant 0 : index
    %c640 = arith.constant 640 : index
    %2 = vector.load %arg8[%c0_2, %c640] : memref<1x896xf32, #tpu.memory_space<vmem>>, vector<1x128xf32>
    %c0_3 = arith.constant 0 : index
    %c768 = arith.constant 768 : index
    %3 = vector.load %arg8[%c0_3, %c768] : memref<1x896xf32, #tpu.memory_space<vmem>>, vector<1x128xf32>
    %c0_4 = arith.constant 0 : index
    %c0_5 = arith.constant 0 : index
    %4 = vector.load %arg1[%c0_4, %c0_5] : memref<2x512xbf16, #tpu.memory_space<vmem>>, vector<2x512xbf16>
    %c0_6 = arith.constant 0 : index
    %c0_7 = arith.constant 0 : index
    %5 = vector.load %arg3[%c0_6, %c0_7] : memref<512x384xbf16, #tpu.memory_space<vmem>>, vector<512x384xbf16>
    %cst = arith.constant dense<0.000000e+00> : vector<2x384xf32>
    %6 = tpu.matmul %4, %5, %cst {dimension_numbers = #tpu.dot_dimension_numbers<[1], [0], [0], [1], [0, 0, 1, 1], [], []>} : vector<2x512xbf16>, vector<512x384xbf16>, vector<2x384xf32> -> vector<2x384xf32>
    %7 = vector.broadcast %0 : vector<1x384xf32> to vector<2x384xf32>
    %8 = arith.addf %6, %7 : vector<2x384xf32>
    %cst_8 = arith.constant 0.000000e+00 : f32
    %9 = vector.broadcast %cst_8 : f32 to vector<2x384xf32>
    %10 = arith.maximumf %8, %9 : vector<2x384xf32>
    %11 = arith.truncf %10 : vector<2x384xf32> to vector<2x384xbf16>
    %c0_9 = arith.constant 0 : index
    %c0_10 = arith.constant 0 : index
    %12 = vector.load %arg4[%c0_9, %c0_10] : memref<384x256xbf16, #tpu.memory_space<vmem>>, vector<384x256xbf16>
    %cst_11 = arith.constant dense<0.000000e+00> : vector<2x256xf32>
    %13 = tpu.matmul %11, %12, %cst_11 {dimension_numbers = #tpu.dot_dimension_numbers<[1], [0], [0], [1], [0, 0, 1, 1], [], []>} : vector<2x384xbf16>, vector<384x256xbf16>, vector<2x256xf32> -> vector<2x256xf32>
    %c0_12 = arith.constant 0 : index
    %c0_13 = arith.constant 0 : index
    %14 = vector.load %arg2[%c0_12, %c0_13] : memref<2x8xbf16, #tpu.memory_space<vmem>>, vector<2x8xbf16>
    %c0_14 = arith.constant 0 : index
    %c0_15 = arith.constant 0 : index
    %15 = vector.load %arg5[%c0_14, %c0_15] : memref<8x256xbf16, #tpu.memory_space<vmem>>, vector<8x256xbf16>
    %cst_16 = arith.constant dense<0.000000e+00> : vector<2x256xf32>
    %16 = tpu.matmul %14, %15, %cst_16 {dimension_numbers = #tpu.dot_dimension_numbers<[1], [0], [0], [1], [0, 0, 1, 1], [], []>} : vector<2x8xbf16>, vector<8x256xbf16>, vector<2x256xf32> -> vector<2x256xf32>
    %17 = arith.addf %13, %16 : vector<2x256xf32>
    %18 = vector.broadcast %1 : vector<1x256xf32> to vector<2x256xf32>
    %19 = arith.addf %17, %18 : vector<2x256xf32>
    %cst_17 = arith.constant 0.000000e+00 : f32
    %20 = vector.broadcast %cst_17 : f32 to vector<2x256xf32>
    %21 = arith.maximumf %19, %20 : vector<2x256xf32>
    %22 = arith.truncf %21 : vector<2x256xf32> to vector<2x256xbf16>
    %c0_18 = arith.constant 0 : index
    %c0_19 = arith.constant 0 : index
    %23 = vector.load %arg6[%c0_18, %c0_19] : memref<256x128xbf16, #tpu.memory_space<vmem>>, vector<256x128xbf16>
    %cst_20 = arith.constant dense<0.000000e+00> : vector<2x128xf32>
    %24 = tpu.matmul %22, %23, %cst_20 {dimension_numbers = #tpu.dot_dimension_numbers<[1], [0], [0], [1], [0, 0, 1, 1], [], []>} : vector<2x256xbf16>, vector<256x128xbf16>, vector<2x128xf32> -> vector<2x128xf32>
    %25 = vector.broadcast %2 : vector<1x128xf32> to vector<2x128xf32>
    %26 = arith.addf %24, %25 : vector<2x128xf32>
    %cst_21 = arith.constant 0.000000e+00 : f32
    %27 = vector.broadcast %cst_21 : f32 to vector<2x128xf32>
    %28 = arith.maximumf %26, %27 : vector<2x128xf32>
    %29 = arith.truncf %28 : vector<2x128xf32> to vector<2x128xbf16>
    %c0_22 = arith.constant 0 : index
    %c0_23 = arith.constant 0 : index
    %30 = vector.load %arg7[%c0_22, %c0_23] : memref<128x128xbf16, #tpu.memory_space<vmem>>, vector<128x128xbf16>
    %cst_24 = arith.constant dense<0.000000e+00> : vector<2x128xf32>
    %31 = tpu.matmul %29, %30, %cst_24 {dimension_numbers = #tpu.dot_dimension_numbers<[1], [0], [0], [1], [0, 0, 1, 1], [], []>} : vector<2x128xbf16>, vector<128x128xbf16>, vector<2x128xf32> -> vector<2x128xf32>
    %32 = vector.broadcast %3 : vector<1x128xf32> to vector<2x128xf32>
    %33 = arith.addf %31, %32 : vector<2x128xf32>
    %cst_25 = arith.constant 0.000000e+00 : f32
    %34 = vector.broadcast %cst_25 : f32 to vector<2x128xf32>
    %35 = arith.maximumf %33, %34 : vector<2x128xf32>
    %36 = math.absf %33 : vector<2x128xf32>
    %cst_26 = arith.constant 0.000000e+00 : f32
    %37 = vector.broadcast %cst_26 : f32 to vector<2x128xf32>
    %38 = arith.subf %37, %36 : vector<2x128xf32>
    %39 = math.exp %38 : vector<2x128xf32>
    %40 = math.log1p %39 : vector<2x128xf32>
    %41 = arith.addf %35, %40 : vector<2x128xf32>
    %cst_27 = arith.constant 9.99999997E-7 : f32
    %42 = vector.broadcast %cst_27 : f32 to vector<2x128xf32>
    %43 = arith.addf %41, %42 : vector<2x128xf32>
    %c0_28 = arith.constant 0 : index
    %c0_29 = arith.constant 0 : index
    %44 = vector.load %arg9[%c0_28, %c0_29] : memref<2x128xf32, #tpu.memory_space<vmem>>, vector<2x128xf32>
    tpu.vector_store %arg9[%c0_28, %c0_29], %43 {strides = array<i32>} : memref<2x128xf32, #tpu.memory_space<vmem>>, vector<2x128xf32>,
    return
  }
  func.func @transform_0(%arg0: i32) -> (i32, i32) {
    %c0_i32 = arith.constant 0 : i32
    %c0_i32_0 = arith.constant 0 : i32
    return %arg0, %c0_i32 : i32, i32
  }
  func.func @transform_1(%arg0: i32) -> (i32, i32) {
    %c0_i32 = arith.constant 0 : i32
    %c0_i32_0 = arith.constant 0 : i32
    return %arg0, %c0_i32 : i32, i32
  }
  func.func @transform_2(%arg0: i32) -> (i32, i32) {
    %c0_i32 = arith.constant 0 : i32
    %c0_i32_0 = arith.constant 0 : i32
    %c0_i32_1 = arith.constant 0 : i32
    return %c0_i32, %c0_i32_0 : i32, i32
  }
  func.func @transform_3(%arg0: i32) -> (i32, i32) {
    %c0_i32 = arith.constant 0 : i32
    %c0_i32_0 = arith.constant 0 : i32
    %c0_i32_1 = arith.constant 0 : i32
    return %c0_i32, %c0_i32_0 : i32, i32
  }
  func.func @transform_4(%arg0: i32) -> (i32, i32) {
    %c0_i32 = arith.constant 0 : i32
    %c0_i32_0 = arith.constant 0 : i32
    %c0_i32_1 = arith.constant 0 : i32
    return %c0_i32, %c0_i32_0 : i32, i32
  }
  func.func @transform_5(%arg0: i32) -> (i32, i32) {
    %c0_i32 = arith.constant 0 : i32
    %c0_i32_0 = arith.constant 0 : i32
    %c0_i32_1 = arith.constant 0 : i32
    return %c0_i32, %c0_i32_0 : i32, i32
  }
  func.func @transform_6(%arg0: i32) -> (i32, i32) {
    %c0_i32 = arith.constant 0 : i32
    %c0_i32_0 = arith.constant 0 : i32
    %c0_i32_1 = arith.constant 0 : i32
    return %c0_i32, %c0_i32_0 : i32, i32
  }
  func.func @transform_7(%arg0: i32) -> (i32, i32) {
    %c0_i32 = arith.constant 0 : i32
    %c0_i32_0 = arith.constant 0 : i32
    %c0_i32_1 = arith.constant 0 : i32
    return %c0_i32, %c0_i32_0 : i32, i32
  }
  func.func @transform_8(%arg0: i32) -> (i32, i32) {
    %c0_i32 = arith.constant 0 : i32
    %c0_i32_0 = arith.constant 0 : i32
    return %arg0, %c0_i32 : i32, i32
  }
}

</mosaic_0001>

<llo_original>
// kernel: actor_cnn_forward.1
$region0: #{actor_cnn_forward.1}
  #allocation0 [shape = 'u32[]', space=smem, size = 0x4, offset = 0x4, fixed_abs, tag = 'smem constant byte address 0x4 - core index']
  #allocation1 [shape = 'u32[144,128]{1,0:T(1,128)}', space=vmem, size = 0x12000, scoped, tag = 'internal scratch']
  %s0 = inlined_call_operand.vmem [shape: bf16[2,512], index: 0, kind: input, shape index: {}]
  %s1 = inlined_call_operand.vmem [shape: bf16[2,8], index: 1, kind: input, shape index: {}]
  %s2 = inlined_call_operand.hbm [shape: bf16[512,384], index: 2, kind: input, shape index: {}]
  %s3 = inlined_call_operand.hbm [shape: bf16[384,256], index: 3, kind: input, shape index: {}]
  %s4 = inlined_call_operand.vmem [shape: bf16[8,256], index: 4, kind: input, shape index: {}]
  %s5 = inlined_call_operand.vmem [shape: bf16[256,128], index: 5, kind: input, shape index: {}]
  %s6 = inlined_call_operand.vmem [shape: bf16[128,128], index: 6, kind: input, shape index: {}]
  %s7 = inlined_call_operand.vmem [shape: f32[1,896], index: 7, kind: input, shape index: {}]
  %s8 = inlined_call_operand.hbm [shape: f32[2,128], index: 8, kind: output, shape index: {}]
  %s9 = sld [smem:[#allocation0]]
  $region50: #{actor_cnn_forward.1} parent=0
    _
  %s11 = ssub.s32 1, %s9
  %s12 = scalar_select 0, %s11, %s9
  $region1: #{actor_cnn_forward.1} parent=0
    #allocation2 [shape = 'u8[393216]{0}', space=vmem, size = 0x60000, scoped, tag = 'input window, operand 2, single buffered']
    #allocation3 [shape = 's32[1]{0}', space=sflag, size = 0x4, scoped, tag = 'scoped memory for actor_cnn_forward.1']
    #allocation4 [shape = 's32[1]{0}', space=sflag, size = 0x4, scoped, tag = 'scoped memory for actor_cnn_forward.1']
    #allocation5 [shape = 'u8[196608]{0}', space=vmem, size = 0x30000, scoped, tag = 'input window, operand 3, single buffered']
    #allocation6 [shape = 's32[1]{0}', space=sflag, size = 0x4, scoped, tag = 'scoped memory for actor_cnn_forward.1']
    #allocation7 [shape = 'u8[1024]{0}', space=vmem, size = 0x400, scoped, tag = 'output window, operand 0, single buffered']
    %13 = vsyncpa [#allocation3], 0
    %14 = vsyncpa [#allocation6], 0
    %15 = vsyncpa [#allocation4], 0
    // Predicated region
    $region2: #{actor_cnn_forward.1} parent=1 // pred_check
      _
    $region3: #{actor_cnn_forward.1} parent=1 // pred_check_branch
      %17 = sbr.rel (0) target = $region5
    $region4: #{actor_cnn_forward.1} parent=1 // pred_region
      _
    $region5: #{actor_cnn_forward.1} parent=1 // pred_fallthru
      _
    // Predicated region
    $region6: #{actor_cnn_forward.1} parent=1 // pred_check
      _
    $region7: #{actor_cnn_forward.1} parent=1 // pred_check_branch
      %19 = sbr.rel (0) target = $region9
    $region8: #{actor_cnn_forward.1} parent=1 // pred_region
      _
    $region9: #{actor_cnn_forward.1} parent=1 // pred_fallthru
      _
    // Predicated region
    $region10: #{actor_cnn_forward.1} parent=1 // pred_check
      _
    $region11: #{actor_cnn_forward.1} parent=1 // pred_check_branch
      %21 = sbr.rel (0) target = $region13
    $region12: #{actor_cnn_forward.1} parent=1 // pred_region
      %s23 = ssub.s32 12288, 12288
      %24 = vsyncadd [#allocation3], %s23
      %s25 = sshll.u32 [#allocation2], 4
      %s26 = int_to_ptr.vmem [resolvable:$true] %s25
      %31 = dma.hbm_to_vmem [thread:$0]  %s2, 12288, %s26, [#allocation3], 192, 192, 12
    $region13: #{actor_cnn_forward.1} parent=1 // pred_fallthru
      _
    // Predicated region
    $region14: #{actor_cnn_forward.1} parent=1 // pred_check
      _
    $region15: #{actor_cnn_forward.1} parent=1 // pred_check_branch
      %33 = sbr.rel (0) target = $region17
    $region16: #{actor_cnn_forward.1} parent=1 // pred_region
      %s35 = ssub.s32 6144, 6144
      %36 = vsyncadd [#allocation6], %s35
      %s37 = sshll.u32 [#allocation5], 4
      %s38 = int_to_ptr.vmem [resolvable:$true] %s37
      %43 = dma.hbm_to_vmem [thread:$0]  %s3, 6144, %s38, [#allocation6], 128, 128, 8
    $region17: #{actor_cnn_forward.1} parent=1 // pred_fallthru
      _
    // Predicated region
    $region18: #{actor_cnn_forward.1} parent=1 // pred_check
      _
    $region19: #{actor_cnn_forward.1} parent=1 // pred_check_branch
      %45 = sbr.rel (0) target = $region21
    $region20: #{actor_cnn_forward.1} parent=1 // pred_region
      _
    $region21: #{actor_cnn_forward.1} parent=1 // pred_fallthru
      _
    // Predicated region
    $region22: #{actor_cnn_forward.1} parent=1 // pred_check
      _
    $region23: #{actor_cnn_forward.1} parent=1 // pred_check_branch
      %47 = sbr.rel (0) target = $region25
    $region24: #{actor_cnn_forward.1} parent=1 // pred_region
      _
    $region25: #{actor_cnn_forward.1} parent=1 // pred_fallthru
      _
    // Predicated region
    $region26: #{actor_cnn_forward.1} parent=1 // pred_check
      _
    $region27: #{actor_cnn_forward.1} parent=1 // pred_check_branch
      %49 = sbr.rel (0) target = $region29
    $region28: #{actor_cnn_forward.1} parent=1 // pred_region
      _
    $region29: #{actor_cnn_forward.1} parent=1 // pred_fallthru
      _
    // Predicated region
    $region30: #{actor_cnn_forward.1} parent=1 // pred_check
      _
    $region31: #{actor_cnn_forward.1} parent=1 // pred_check_branch
      %51 = sbr.rel (0) target = $region33
    $region32: #{actor_cnn_forward.1} parent=1 // pred_region
      _
    $region33: #{actor_cnn_forward.1} parent=1 // pred_fallthru
      _
    // Predicated region
    $region34: #{actor_cnn_forward.1} parent=1 // pred_check
      _
    $region35: #{actor_cnn_forward.1} parent=1 // pred_check_branch
      %53 = sbr.rel (0) target = $region37
    $region36: #{actor_cnn_forward.1} parent=1 // pred_region
      %54 = dma.done [#allocation3], 12288
    $region37: #{actor_cnn_forward.1} parent=1 // pred_fallthru
      _
    // Predicated region
    $region38: #{actor_cnn_forward.1} parent=1 // pred_check
      _
    $region39: #{actor_cnn_forward.1} parent=1 // pred_check_branch
      %56 = sbr.rel (0) target = $region41
    $region40: #{actor_cnn_forward.1} parent=1 // pred_region
      %57 = dma.done [#allocation6], 6144
    $region41: #{actor_cnn_forward.1} parent=1 // pred_fallthru
      _
    %v59 = vld [vmem:[%s7] sm:$0x7]
    %v60 = vld [vmem:[%s7 + $0x3] sm:$0x3]
    %v61 = vld [vmem:[%s7 + $0x5] sm:$0x1]
    %v62 = vld [vmem:[%s7 + $0x6] sm:$0x1]
    %v63 = vld [vmem:[%s0] sm:$0xf]
    %v64 = vld [vmem:[#allocation2] sm:$0xff]
    %v65 = vld [vmem:[#allocation2 + $0x8] sm:$0xf]
    %v66 = vld [vmem:[#allocation2 + $0xc] sm:$0xff]
    %v67 = vld [vmem:[#allocation2 + $0x14] sm:$0xf]
    %v68 = vld [vmem:[#allocation2 + $0x18] sm:$0xff]
    %v69 = vld [vmem:[#allocation2 + $0x20] sm:$0xf]
    %v70 = vld [vmem:[#allocation2 + $0x24] sm:$0xff]
    %v71 = vld [vmem:[#allocation2 + $0x2c] sm:$0xf]
    %v72 = vld [vmem:[#allocation2 + $0x30] sm:$0xff]
    %v73 = vld [vmem:[#allocation2 + $0x38] sm:$0xf]
    %v74 = vld [vmem:[#allocation2 + $0x3c] sm:$0xff]
    %v75 = vld [vmem:[#allocation2 + $0x44] sm:$0xf]
    %v76 = vld [vmem:[#allocation2 + $0x48] sm:$0xff]
    %v77 = vld [vmem:[#allocation2 + $0x50] sm:$0xf]
    %v78 = vld [vmem:[#allocation2 + $0x54] sm:$0xff]
    %v79 = vld [vmem:[#allocation2 + $0x5c] sm:$0xf]
    %v80 = vld [vmem:[#allocation2 + $0x60] sm:$0xff]
    %v81 = vld [vmem:[#allocation2 + $0x68] sm:$0xf]
    %v82 = vld [vmem:[#allocation2 + $0x6c] sm:$0xff]
    %v83 = vld [vmem:[#allocation2 + $0x74] sm:$0xf]
    %v84 = vld [vmem:[#allocation2 + $0x78] sm:$0xff]
    %v85 = vld [vmem:[#allocation2 + $0x80] sm:$0xf]
    %v86 = vld [vmem:[#allocation2 + $0x84] sm:$0xff]
    %v87 = vld [vmem:[#allocation2 + $0x8c] sm:$0xf]
    %v88 = vld [vmem:[#allocation2 + $0x90] sm:$0xff]
    %v89 = vld [vmem:[#allocation2 + $0x98] sm:$0xf]
    %v90 = vld [vmem:[#allocation2 + $0x9c] sm:$0xff]
    %v91 = vld [vmem:[#allocation2 + $0xa4] sm:$0xf]
    %v92 = vld [vmem:[#allocation2 + $0xa8] sm:$0xff]
    %v93 = vld [vmem:[#allocation2 + $0xb0] sm:$0xf]
    %v94 = vld [vmem:[#allocation2 + $0xb4] sm:$0xff]
    %v95 = vld [vmem:[#allocation2 + $0xbc] sm:$0xf]
    %v96 = vld [vmem:[#allocation2 + $0xc0] sm:$0xff]
    %v97 = vld [vmem:[#allocation2 + $0xc8] sm:$0xf]
    %v98 = vld [vmem:[#allocation2 + $0xcc] sm:$0xff]
    %v99 = vld [vmem:[#allocation2 + $0xd4] sm:$0xf]
    %v100 = vld [vmem:[#allocation2 + $0xd8] sm:$0xff]
    %v101 = vld [vmem:[#allocation2 + $0xe0] sm:$0xf]
    %v102 = vld [vmem:[#allocation2 + $0xe4] sm:$0xff]
    %v103 = vld [vmem:[#allocation2 + $0xec] sm:$0xf]
    %v104 = vld [vmem:[#allocation2 + $0xf0] sm:$0xff]
    %v105 = vld [vmem:[#allocation2 + $0xf8] sm:$0xf]
    %v106 = vld [vmem:[#allocation2 + $0xfc] sm:$0xff]
    %v107 = vld [vmem:[#allocation2 + $0x104] sm:$0xf]
    %v108 = vld [vmem:[#allocation2 + $0x108] sm:$0xff]
    %v109 = vld [vmem:[#allocation2 + $0x110] sm:$0xf]
    %v110 = vld [vmem:[#allocation2 + $0x114] sm:$0xff]
    %v111 = vld [vmem:[#allocation2 + $0x11c] sm:$0xf]
    %v112 = vld [vmem:[#allocation2 + $0x120] sm:$0xff]
    %v113 = vld [vmem:[#allocation2 + $0x128] sm:$0xf]
    %v114 = vld [vmem:[#allocation2 + $0x12c] sm:$0xff]
    %v115 = vld [vmem:[#allocation2 + $0x134] sm:$0xf]
    %v116 = vld [vmem:[#allocation2 + $0x138] sm:$0xff]
    %v117 = vld [vmem:[#allocation2 + $0x140] sm:$0xf]
    %v118 = vld [vmem:[#allocation2 + $0x144] sm:$0xff]
    %v119 = vld [vmem:[#allocation2 + $0x14c] sm:$0xf]
    %v120 = vld [vmem:[#allocation2 + $0x150] sm:$0xff]
    %v121 = vld [vmem:[#allocation2 + $0x158] sm:$0xf]
    %v122 = vld [vmem:[#allocation2 + $0x15c] sm:$0xff]
    %v123 = vld [vmem:[#allocation2 + $0x164] sm:$0xf]
    %v124 = vld [vmem:[#allocation2 + $0x168] sm:$0xff]
    %v125 = vld [vmem:[#allocation2 + $0x170] sm:$0xf]
    %v126 = vld [vmem:[#allocation2 + $0x174] sm:$0xff]
    %v127 = vld [vmem:[#allocation2 + $0x17c] sm:$0xf]
    %v128 = vld [vmem:[#allocation2 + $0x180] sm:$0xff]
    %v129 = vld [vmem:[#allocation2 + $0x188] sm:$0xf]
    %v130 = vld [vmem:[#allocation2 + $0x18c] sm:$0xff]
    %v131 = vld [vmem:[#allocation2 + $0x194] sm:$0xf]
    %v132 = vld [vmem:[#allocation2 + $0x198] sm:$0xff]
    %v133 = vld [vmem:[#allocation2 + $0x1a0] sm:$0xf]
    %v134 = vld [vmem:[#allocation2 + $0x1a4] sm:$0xff]
    %v135 = vld [vmem:[#allocation2 + $0x1ac] sm:$0xf]
    %v136 = vld [vmem:[#allocation2 + $0x1b0] sm:$0xff]
    %v137 = vld [vmem:[#allocation2 + $0x1b8] sm:$0xf]
    %v138 = vld [vmem:[#allocation2 + $0x1bc] sm:$0xff]
    %v139 = vld [vmem:[#allocation2 + $0x1c4] sm:$0xf]
    %v140 = vld [vmem:[#allocation2 + $0x1c8] sm:$0xff]
    %v141 = vld [vmem:[#allocation2 + $0x1d0] sm:$0xf]
    %v142 = vld [vmem:[#allocation2 + $0x1d4] sm:$0xff]
    %v143 = vld [vmem:[#allocation2 + $0x1dc] sm:$0xf]
    %v144 = vld [vmem:[#allocation2 + $0x1e0] sm:$0xff]
    %v145 = vld [vmem:[#allocation2 + $0x1e8] sm:$0xf]
    %v146 = vld [vmem:[#allocation2 + $0x1ec] sm:$0xff]
    %v147 = vld [vmem:[#allocation2 + $0x1f4] sm:$0xf]
    %v148 = vld [vmem:[#allocation2 + $0x1f8] sm:$0xff]
    %v149 = vld [vmem:[#allocation2 + $0x200] sm:$0xf]
    %v150 = vld [vmem:[#allocation2 + $0x204] sm:$0xff]
    %v151 = vld [vmem:[#allocation2 + $0x20c] sm:$0xf]
    %v152 = vld [vmem:[#allocation2 + $0x210] sm:$0xff]
    %v153 = vld [vmem:[#allocation2 + $0x218] sm:$0xf]
    %v154 = vld [vmem:[#allocation2 + $0x21c] sm:$0xff]
    %v155 = vld [vmem:[#allocation2 + $0x224] sm:$0xf]
    %v156 = vld [vmem:[#allocation2 + $0x228] sm:$0xff]
    %v157 = vld [vmem:[#allocation2 + $0x230] sm:$0xf]
    %v158 = vld [vmem:[#allocation2 + $0x234] sm:$0xff]
    %v159 = vld [vmem:[#allocation2 + $0x23c] sm:$0xf]
    %v160 = vld [vmem:[#allocation2 + $0x240] sm:$0xff]
    %v161 = vld [vmem:[#allocation2 + $0x248] sm:$0xf]
    %v162 = vld [vmem:[#allocation2 + $0x24c] sm:$0xff]
    %v163 = vld [vmem:[#allocation2 + $0x254] sm:$0xf]
    %v164 = vld [vmem:[#allocation2 + $0x258] sm:$0xff]
    %v165 = vld [vmem:[#allocation2 + $0x260] sm:$0xf]
    %v166 = vld [vmem:[#allocation2 + $0x264] sm:$0xff]
    %v167 = vld [vmem:[#allocation2 + $0x26c] sm:$0xf]
    %v168 = vld [vmem:[#allocation2 + $0x270] sm:$0xff]
    %v169 = vld [vmem:[#allocation2 + $0x278] sm:$0xf]
    %v170 = vld [vmem:[#allocation2 + $0x27c] sm:$0xff]
    %v171 = vld [vmem:[#allocation2 + $0x284] sm:$0xf]
    %v172 = vld [vmem:[#allocation2 + $0x288] sm:$0xff]
    %v173 = vld [vmem:[#allocation2 + $0x290] sm:$0xf]
    %v174 = vld [vmem:[#allocation2 + $0x294] sm:$0xff]
    %v175 = vld [vmem:[#allocation2 + $0x29c] sm:$0xf]
    %v176 = vld [vmem:[#allocation2 + $0x2a0] sm:$0xff]
    %v177 = vld [vmem:[#allocation2 + $0x2a8] sm:$0xf]
    %v178 = vld [vmem:[#allocation2 + $0x2ac] sm:$0xff]
    %v179 = vld [vmem:[#allocation2 + $0x2b4] sm:$0xf]
    %v180 = vld [vmem:[#allocation2 + $0x2b8] sm:$0xff]
    %v181 = vld [vmem:[#allocation2 + $0x2c0] sm:$0xf]
    %v182 = vld [vmem:[#allocation2 + $0x2c4] sm:$0xff]
    %v183 = vld [vmem:[#allocation2 + $0x2cc] sm:$0xf]
    %v184 = vld [vmem:[#allocation2 + $0x2d0] sm:$0xff]
    %v185 = vld [vmem:[#allocation2 + $0x2d8] sm:$0xf]
    %v186 = vld [vmem:[#allocation2 + $0x2dc] sm:$0xff]
    %v187 = vld [vmem:[#allocation2 + $0x2e4] sm:$0xf]
    %v188 = vld [vmem:[#allocation2 + $0x2e8] sm:$0xff]
    %v189 = vld [vmem:[#allocation2 + $0x2f0] sm:$0xf]
    %v190 = vld [vmem:[#allocation2 + $0x2f4] sm:$0xff]
    %v191 = vld [vmem:[#allocation2 + $0x2fc] sm:$0xf]
    %v193 = vlaneseq
    %v194 = vshrl.u32 %v193, 7
    %v195 = vsub.s32 0, %v194
    %v196 = vrot.slane %v59, %v195
    %v197 = vlaneseq
    %v198 = vshrl.u32 %v197, 7
    %v199 = vsub.s32 1, %v198
    %v200 = vrot.slane %v59, %v199
    %v201 = vlaneseq
    %v202 = vshrl.u32 %v201, 7
    %v203 = vsub.s32 2, %v202
    %v204 = vrot.slane %v59, %v203
    %v210 = vunpack.c.l.s4 1966171168
    %v211 = vunpack.c.0.s8 %v210
    %v212 = vlaneseq
    %v213 = vshrl.u32 %v212, 7
    %v214 = vsub.s32 %v211, %v213
    %v215 = vrot.slane %v63, %v214
    %v216 = vcombine.high %v215, %v215
    %v218 = vunpack.c.l.s4 1966171168
    %v219 = vunpack.c.0.s8 %v218
    %v220 = vlaneseq
    %v221 = vshrl.u32 %v220, 7
    %v222 = vsub.s32 %v219, %v221
    %v223 = vrot.slane %v215, %v222
    %v225 = vunpack.c.l.s4 1966171168
    %v226 = vunpack.c.0.s8 %v225
    %v227 = vlaneseq
    %v228 = vshrl.u32 %v227, 7
    %v229 = vsub.s32 %v226, %v228
    %v230 = vrot.slane %v216, %v229
    %v231 = vcombine.high %v223, %v223
    %v232 = vcombine.high %v230, %v230
    %v365 = vunpack.c.l.b16 %v64
    %v366 = vunpack.c.h.b16 %v64
    %v367 = vunpack.c.l.b16 %v65
    %v368 = vunpack.c.l.b16 %v66
    %v369 = vunpack.c.h.b16 %v66
    %v370 = vunpack.c.l.b16 %v67
    %v371 = vunpack.c.l.b16 %v68
    %v372 = vunpack.c.h.b16 %v68
    %v373 = vunpack.c.l.b16 %v69
    %v374 = vunpack.c.l.b16 %v70
    %v375 = vunpack.c.h.b16 %v70
    %v376 = vunpack.c.l.b16 %v71
    %v377 = vunpack.c.l.b16 %v72
    %v378 = vunpack.c.h.b16 %v72
    %v379 = vunpack.c.l.b16 %v73
    %v380 = vunpack.c.l.b16 %v74
    %v381 = vunpack.c.h.b16 %v74
    %v382 = vunpack.c.l.b16 %v75
    %v383 = vunpack.c.l.b16 %v76
    %v384 = vunpack.c.h.b16 %v76
    %v385 = vunpack.c.l.b16 %v77
    %v386 = vunpack.c.l.b16 %v78
    %v387 = vunpack.c.h.b16 %v78
    %v388 = vunpack.c.l.b16 %v79
    %v389 = vunpack.c.l.b16 %v80
    %v390 = vunpack.c.h.b16 %v80
    %v391 = vunpack.c.l.b16 %v81
    %v392 = vunpack.c.l.b16 %v82
    %v393 = vunpack.c.h.b16 %v82
    %v394 = vunpack.c.l.b16 %v83
    %v395 = vunpack.c.l.b16 %v84
    %v396 = vunpack.c.h.b16 %v84
    %v397 = vunpack.c.l.b16 %v85
    %v398 = vunpack.c.l.b16 %v86
    %v399 = vunpack.c.h.b16 %v86
    %v400 = vunpack.c.l.b16 %v87
    %v401 = vunpack.c.l.b16 %v88
    %v402 = vunpack.c.h.b16 %v88
    %v403 = vunpack.c.l.b16 %v89
    %v404 = vunpack.c.l.b16 %v90
    %v405 = vunpack.c.h.b16 %v90
    %v406 = vunpack.c.l.b16 %v91
    %v407 = vunpack.c.l.b16 %v92
    %v408 = vunpack.c.h.b16 %v92
    %v409 = vunpack.c.l.b16 %v93
    %v410 = vunpack.c.l.b16 %v94
    %v411 = vunpack.c.h.b16 %v94
    %v412 = vunpack.c.l.b16 %v95
    %v413 = vunpack.c.l.b16 %v96
    %v414 = vunpack.c.h.b16 %v96
    %v415 = vunpack.c.l.b16 %v97
    %v416 = vunpack.c.l.b16 %v98
    %v417 = vunpack.c.h.b16 %v98
    %v418 = vunpack.c.l.b16 %v99
    %v419 = vunpack.c.l.b16 %v100
    %v420 = vunpack.c.h.b16 %v100
    %v421 = vunpack.c.l.b16 %v101
    %v422 = vunpack.c.l.b16 %v102
    %v423 = vunpack.c.h.b16 %v102
    %v424 = vunpack.c.l.b16 %v103
    %v425 = vunpack.c.l.b16 %v104
    %v426 = vunpack.c.h.b16 %v104
    %v427 = vunpack.c.l.b16 %v105
    %v428 = vunpack.c.l.b16 %v106
    %v429 = vunpack.c.h.b16 %v106
    %v430 = vunpack.c.l.b16 %v107
    %v431 = vunpack.c.l.b16 %v108
    %v432 = vunpack.c.h.b16 %v108
    %v433 = vunpack.c.l.b16 %v109
    %v434 = vunpack.c.l.b16 %v110
    %v435 = vunpack.c.h.b16 %v110
    %v436 = vunpack.c.l.b16 %v111
    %v437 = vunpack.c.l.b16 %v112
    %v438 = vunpack.c.h.b16 %v112
    %v439 = vunpack.c.l.b16 %v113
    %v440 = vunpack.c.l.b16 %v114
    %v441 = vunpack.c.h.b16 %v114
    %v442 = vunpack.c.l.b16 %v115
    %v443 = vunpack.c.l.b16 %v116
    %v444 = vunpack.c.h.b16 %v116
    %v445 = vunpack.c.l.b16 %v117
    %v446 = vunpack.c.l.b16 %v118
    %v447 = vunpack.c.h.b16 %v118
    %v448 = vunpack.c.l.b16 %v119
    %v449 = vunpack.c.l.b16 %v120
    %v450 = vunpack.c.h.b16 %v120
    %v451 = vunpack.c.l.b16 %v121
    %v452 = vunpack.c.l.b16 %v122
    %v453 = vunpack.c.h.b16 %v122
    %v454 = vunpack.c.l.b16 %v123
    %v455 = vunpack.c.l.b16 %v124
    %v456 = vunpack.c.h.b16 %v124
    %v457 = vunpack.c.l.b16 %v125
    %v458 = vunpack.c.l.b16 %v126
    %v459 = vunpack.c.h.b16 %v126
    %v460 = vunpack.c.l.b16 %v127
    %v461 = vunpack.c.l.b16 %v128
    %v462 = vunpack.c.h.b16 %v128
    %v463 = vunpack.c.l.b16 %v129
    %v464 = vunpack.c.l.b16 %v130
    %v465 = vunpack.c.h.b16 %v130
    %v466 = vunpack.c.l.b16 %v131
    %v467 = vunpack.c.l.b16 %v132
    %v468 = vunpack.c.h.b16 %v132
    %v469 = vunpack.c.l.b16 %v133
    %v470 = vunpack.c.l.b16 %v134
    %v471 = vunpack.c.h.b16 %v134
    %v472 = vunpack.c.l.b16 %v135
    %v473 = vunpack.c.l.b16 %v136
    %v474 = vunpack.c.h.b16 %v136
    %v475 = vunpack.c.l.b16 %v137
    %v476 = vunpack.c.l.b16 %v138
    %v477 = vunpack.c.h.b16 %v138
    %v478 = vunpack.c.l.b16 %v139
    %v479 = vunpack.c.l.b16 %v140
    %v480 = vunpack.c.h.b16 %v140
    %v481 = vunpack.c.l.b16 %v141
    %v482 = vunpack.c.l.b16 %v142
    %v483 = vunpack.c.h.b16 %v142
    %v484 = vunpack.c.l.b16 %v143
    %v485 = vunpack.c.l.b16 %v144
    %v486 = vunpack.c.h.b16 %v144
    %v487 = vunpack.c.l.b16 %v145
    %v488 = vunpack.c.l.b16 %v146
    %v489 = vunpack.c.h.b16 %v146
    %v490 = vunpack.c.l.b16 %v147
    %v491 = vunpack.c.l.b16 %v148
    %v492 = vunpack.c.h.b16 %v148
    %v493 = vunpack.c.l.b16 %v149
    %v494 = vunpack.c.l.b16 %v150
    %v495 = vunpack.c.h.b16 %v150
    %v496 = vunpack.c.l.b16 %v151
    %v497 = vunpack.c.l.b16 %v152
    %v498 = vunpack.c.h.b16 %v152
    %v499 = vunpack.c.l.b16 %v153
    %v500 = vunpack.c.l.b16 %v154
    %v501 = vunpack.c.h.b16 %v154
    %v502 = vunpack.c.l.b16 %v155
    %v503 = vunpack.c.l.b16 %v156
    %v504 = vunpack.c.h.b16 %v156
    %v505 = vunpack.c.l.b16 %v157
    %v506 = vunpack.c.l.b16 %v158
    %v507 = vunpack.c.h.b16 %v158
    %v508 = vunpack.c.l.b16 %v159
    %v509 = vunpack.c.l.b16 %v160
    %v510 = vunpack.c.h.b16 %v160
    %v511 = vunpack.c.l.b16 %v161
    %v512 = vunpack.c.l.b16 %v162
    %v513 = vunpack.c.h.b16 %v162
    %v514 = vunpack.c.l.b16 %v163
    %v515 = vunpack.c.l.b16 %v164
    %v516 = vunpack.c.h.b16 %v164
    %v517 = vunpack.c.l.b16 %v165
    %v518 = vunpack.c.l.b16 %v166
    %v519 = vunpack.c.h.b16 %v166
    %v520 = vunpack.c.l.b16 %v167
    %v521 = vunpack.c.l.b16 %v168
    %v522 = vunpack.c.h.b16 %v168
    %v523 = vunpack.c.l.b16 %v169
    %v524 = vunpack.c.l.b16 %v170
    %v525 = vunpack.c.h.b16 %v170
    %v526 = vunpack.c.l.b16 %v171
    %v527 = vunpack.c.l.b16 %v172
    %v528 = vunpack.c.h.b16 %v172
    %v529 = vunpack.c.l.b16 %v173
    %v530 = vunpack.c.l.b16 %v174
    %v531 = vunpack.c.h.b16 %v174
    %v532 = vunpack.c.l.b16 %v175
    %v533 = vunpack.c.l.b16 %v176
    %v534 = vunpack.c.h.b16 %v176
    %v535 = vunpack.c.l.b16 %v177
    %v536 = vunpack.c.l.b16 %v178
    %v537 = vunpack.c.h.b16 %v178
    %v538 = vunpack.c.l.b16 %v179
    %v539 = vunpack.c.l.b16 %v180
    %v540 = vunpack.c.h.b16 %v180
    %v541 = vunpack.c.l.b16 %v181
    %v542 = vunpack.c.l.b16 %v182
    %v543 = vunpack.c.h.b16 %v182
    %v544 = vunpack.c.l.b16 %v183
    %v545 = vunpack.c.l.b16 %v184
    %v546 = vunpack.c.h.b16 %v184
    %v547 = vunpack.c.l.b16 %v185
    %v548 = vunpack.c.l.b16 %v186
    %v549 = vunpack.c.h.b16 %v186
    %v550 = vunpack.c.l.b16 %v187
    %v551 = vunpack.c.l.b16 %v188
    %v552 = vunpack.c.h.b16 %v188
    %v553 = vunpack.c.l.b16 %v189
    %v554 = vunpack.c.l.b16 %v190
    %v555 = vunpack.c.h.b16 %v190
    %v556 = vunpack.c.l.b16 %v191
    %v557 = vpack.c.b16 %v368, %v365
    %v558 = vpack.c.b16 %v369, %v366
    %v559 = vpack.c.b16 %v370, %v367
    %v560 = vpack.c.b16 %v374, %v371
    %v561 = vpack.c.b16 %v375, %v372
    %v562 = vpack.c.b16 %v376, %v373
    %v563 = vpack.c.b16 %v380, %v377
    %v564 = vpack.c.b16 %v381, %v378
    %v565 = vpack.c.b16 %v382, %v379
    %v566 = vpack.c.b16 %v386, %v383
    %v567 = vpack.c.b16 %v387, %v384
    %v568 = vpack.c.b16 %v388, %v385
    %v569 = vpack.c.b16 %v392, %v389
    %v570 = vpack.c.b16 %v393, %v390
    %v571 = vpack.c.b16 %v394, %v391
    %v572 = vpack.c.b16 %v398, %v395
    %v573 = vpack.c.b16 %v399, %v396
    %v574 = vpack.c.b16 %v400, %v397
    %v575 = vpack.c.b16 %v404, %v401
    %v576 = vpack.c.b16 %v405, %v402
    %v577 = vpack.c.b16 %v406, %v403
    %v578 = vpack.c.b16 %v410, %v407
    %v579 = vpack.c.b16 %v411, %v408
    %v580 = vpack.c.b16 %v412, %v409
    %v581 = vpack.c.b16 %v416, %v413
    %v582 = vpack.c.b16 %v417, %v414
    %v583 = vpack.c.b16 %v418, %v415
    %v584 = vpack.c.b16 %v422, %v419
    %v585 = vpack.c.b16 %v423, %v420
    %v586 = vpack.c.b16 %v424, %v421
    %v587 = vpack.c.b16 %v428, %v425
    %v588 = vpack.c.b16 %v429, %v426
    %v589 = vpack.c.b16 %v430, %v427
    %v590 = vpack.c.b16 %v434, %v431
    %v591 = vpack.c.b16 %v435, %v432
    %v592 = vpack.c.b16 %v436, %v433
    %v593 = vpack.c.b16 %v440, %v437
    %v594 = vpack.c.b16 %v441, %v438
    %v595 = vpack.c.b16 %v442, %v439
    %v596 = vpack.c.b16 %v446, %v443
    %v597 = vpack.c.b16 %v447, %v444
    %v598 = vpack.c.b16 %v448, %v445
    %v599 = vpack.c.b16 %v452, %v449
    %v600 = vpack.c.b16 %v453, %v450
    %v601 = vpack.c.b16 %v454, %v451
    %v602 = vpack.c.b16 %v458, %v455
    %v603 = vpack.c.b16 %v459, %v456
    %v604 = vpack.c.b16 %v460, %v457
    %v605 = vpack.c.b16 %v464, %v461
    %v606 = vpack.c.b16 %v465, %v462
    %v607 = vpack.c.b16 %v466, %v463
    %v608 = vpack.c.b16 %v470, %v467
    %v609 = vpack.c.b16 %v471, %v468
    %v610 = vpack.c.b16 %v472, %v469
    %v611 = vpack.c.b16 %v476, %v473
    %v612 = vpack.c.b16 %v477, %v474
    %v613 = vpack.c.b16 %v478, %v475
    %v614 = vpack.c.b16 %v482, %v479
    %v615 = vpack.c.b16 %v483, %v480
    %v616 = vpack.c.b16 %v484, %v481
    %v617 = vpack.c.b16 %v488, %v485
    %v618 = vpack.c.b16 %v489, %v486
    %v619 = vpack.c.b16 %v490, %v487
    %v620 = vpack.c.b16 %v494, %v491
    %v621 = vpack.c.b16 %v495, %v492
    %v622 = vpack.c.b16 %v496, %v493
    %v623 = vpack.c.b16 %v500, %v497
    %v624 = vpack.c.b16 %v501, %v498
    %v625 = vpack.c.b16 %v502, %v499
    %v626 = vpack.c.b16 %v506, %v503
    %v627 = vpack.c.b16 %v507, %v504
    %v628 = vpack.c.b16 %v508, %v505
    %v629 = vpack.c.b16 %v512, %v509
    %v630 = vpack.c.b16 %v513, %v510
    %v631 = vpack.c.b16 %v514, %v511
    %v632 = vpack.c.b16 %v518, %v515
    %v633 = vpack.c.b16 %v519, %v516
    %v634 = vpack.c.b16 %v520, %v517
    %v635 = vpack.c.b16 %v524, %v521
    %v636 = vpack.c.b16 %v525, %v522
    %v637 = vpack.c.b16 %v526, %v523
    %v638 = vpack.c.b16 %v530, %v527
    %v639 = vpack.c.b16 %v531, %v528
    %v640 = vpack.c.b16 %v532, %v529
    %v641 = vpack.c.b16 %v536, %v533
    %v642 = vpack.c.b16 %v537, %v534
    %v643 = vpack.c.b16 %v538, %v535
    %v644 = vpack.c.b16 %v542, %v539
    %v645 = vpack.c.b16 %v543, %v540
    %v646 = vpack.c.b16 %v544, %v541
    %v647 = vpack.c.b16 %v548, %v545
    %v648 = vpack.c.b16 %v549, %v546
    %v649 = vpack.c.b16 %v550, %v547
    %v650 = vpack.c.b16 %v554, %v551
    %v651 = vpack.c.b16 %v555, %v552
    %v652 = vpack.c.b16 %v556, %v553
    %749 = vmatprep.subr.bf16.mxu0 %v579
    %750 = vmatpush1.bf16.msra.mxu0 %v578
    %751 = vmatprep.subr.bf16.mxu0 %v576
    %752 = vmatpush1.bf16.msra.mxu0 %v575
    %753 = vmatprep.subr.bf16.mxu0 %v573
    %754 = vmatpush1.bf16.msra.mxu0 %v572
    %755 = vmatprep.subr.bf16.mxu0 %v570
    %756 = vmatpush1.bf16.msra.mxu0 %v569
    %757 = vmatprep.subr.bf16.mxu0 %v567
    %758 = vmatpush1.bf16.msra.mxu0 %v566
    %759 = vmatprep.subr.bf16.mxu0 %v564
    %760 = vmatpush1.bf16.msra.mxu0 %v563
    %761 = vmatprep.subr.bf16.mxu0 %v561
    %762 = vmatpush1.bf16.msra.mxu0 %v560
    %763 = vmatprep.subr.bf16.mxu0 %v558
    %764 = vmatpush1.bf16.msra.mxu0 %v557
    %765 = vmatprep.subr.bf16.mxu0 %v603
    %766 = vmatpush2.bf16.msra.mxu0 %v602
    %767 = vmatprep.subr.bf16.mxu0 %v600
    %768 = vmatpush2.bf16.msra.mxu0 %v599
    %769 = vmatprep.subr.bf16.mxu0 %v597
    %770 = vmatpush2.bf16.msra.mxu0 %v596
    %771 = vmatprep.subr.bf16.mxu0 %v594
    %772 = vmatpush2.bf16.msra.mxu0 %v593
    %773 = vmatprep.subr.bf16.mxu0 %v591
    %774 = vmatpush2.bf16.msra.mxu0 %v590
    %775 = vmatprep.subr.bf16.mxu0 %v588
    %776 = vmatpush2.bf16.msra.mxu0 %v587
    %777 = vmatprep.subr.bf16.mxu0 %v585
    %778 = vmatpush2.bf16.msra.mxu0 %v584
    %779 = vmatprep.subr.bf16.mxu0 %v582
    %780 = vmatpush2.bf16.msra.mxu0 %v581
    %781 = vmatprep.mubr.bf16.mxu0 %v230
    %782 = vmatmul.mubr.bf16.gmra.mxu0 %v223
    %v783 = vpop.f32.mrf.mxu0
    %v784 = vadd.f32 %v196, %v783
    %v785 = vpop.f32.mrf.mxu0
    %v786 = vadd.f32 %v200, %v785
    %v787 = vpop.f32.mrf.mxu0
    %v788 = vpop.f32.mrf.mxu0
    %789 = vdwg.mxu0
    %790 = vmatprep.subr.bf16.mxu0 %v627
    %791 = vmatpush1.bf16.msra.mxu0 %v626
    %792 = vmatprep.subr.bf16.mxu0 %v624
    %793 = vmatpush1.bf16.msra.mxu0 %v623
    %794 = vmatprep.subr.bf16.mxu0 %v621
    %795 = vmatpush1.bf16.msra.mxu0 %v620
    %796 = vmatprep.subr.bf16.mxu0 %v618
    %797 = vmatpush1.bf16.msra.mxu0 %v617
    %798 = vmatprep.subr.bf16.mxu0 %v615
    %799 = vmatpush1.bf16.msra.mxu0 %v614
    %800 = vmatprep.subr.bf16.mxu0 %v612
    %801 = vmatpush1.bf16.msra.mxu0 %v611
    %802 = vmatprep.subr.bf16.mxu0 %v609
    %803 = vmatpush1.bf16.msra.mxu0 %v608
    %804 = vmatprep.subr.bf16.mxu0 %v606
    %805 = vmatpush1.bf16.msra.mxu0 %v605
    %806 = vmatprep.subr.bf16.mxu0 %v651
    %807 = vmatpush2.bf16.msra.mxu0 %v650
    %808 = vmatprep.subr.bf16.mxu0 %v648
    %809 = vmatpush2.bf16.msra.mxu0 %v647
    %810 = vmatprep.subr.bf16.mxu0 %v645
    %811 = vmatpush2.bf16.msra.mxu0 %v644
    %812 = vmatprep.subr.bf16.mxu0 %v642
    %813 = vmatpush2.bf16.msra.mxu0 %v641
    %814 = vmatprep.subr.bf16.mxu0 %v639
    %815 = vmatpush2.bf16.msra.mxu0 %v638
    %816 = vmatprep.subr.bf16.mxu0 %v636
    %817 = vmatpush2.bf16.msra.mxu0 %v635
    %818 = vmatprep.subr.bf16.mxu0 %v633
    %819 = vmatpush2.bf16.msra.mxu0 %v632
    %820 = vmatprep.subr.bf16.mxu0 %v630
    %821 = vmatpush2.bf16.msra.mxu0 %v629
    %822 = vmatprep.mubr.bf16.mxu0 %v232
    %823 = vmatmul.mubr.bf16.gmra.mxu0 %v231
    %v824 = vpop.f32.mrf.mxu0
    %v825 = vadd.f32 %v784, %v824
    %v826 = vpop.f32.mrf.mxu0
    %v827 = vadd.f32 %v786, %v826
    %v828 = vpop.f32.mrf.mxu0
    %v829 = vpop.f32.mrf.mxu0
    %830 = vdwg.mxu0
    %831 = vmatprep.subr.bf16.mxu0 0
    %832 = vmatpush1.bf16.msra.mxu0 %v580
    %833 = vmatprep.subr.bf16.mxu0 0
    %834 = vmatpush1.bf16.msra.mxu0 %v577
    %835 = vmatprep.subr.bf16.mxu0 0
    %836 = vmatpush1.bf16.msra.mxu0 %v574
    %837 = vmatprep.subr.bf16.mxu0 0
    %838 = vmatpush1.bf16.msra.mxu0 %v571
    %839 = vmatprep.subr.bf16.mxu0 0
    %840 = vmatpush1.bf16.msra.mxu0 %v568
    %841 = vmatprep.subr.bf16.mxu0 0
    %842 = vmatpush1.bf16.msra.mxu0 %v565
    %843 = vmatprep.subr.bf16.mxu0 0
    %844 = vmatpush1.bf16.msra.mxu0 %v562
    %845 = vmatprep.subr.bf16.mxu0 0
    %846 = vmatpush1.bf16.msra.mxu0 %v559
    %847 = vmatprep.subr.bf16.mxu0 0
    %848 = vmatpush2.bf16.msra.mxu0 %v604
    %849 = vmatprep.subr.bf16.mxu0 0
    %850 = vmatpush2.bf16.msra.mxu0 %v601
    %851 = vmatprep.subr.bf16.mxu0 0
    %852 = vmatpush2.bf16.msra.mxu0 %v598
    %853 = vmatprep.subr.bf16.mxu0 0
    %854 = vmatpush2.bf16.msra.mxu0 %v595
    %855 = vmatprep.subr.bf16.mxu0 0
    %856 = vmatpush2.bf16.msra.mxu0 %v592
    %857 = vmatprep.subr.bf16.mxu0 0
    %858 = vmatpush2.bf16.msra.mxu0 %v589
    %859 = vmatprep.subr.bf16.mxu0 0
    %860 = vmatpush2.bf16.msra.mxu0 %v586
    %861 = vmatprep.subr.bf16.mxu0 0
    %862 = vmatpush2.bf16.msra.mxu0 %v583
    %863 = vmatprep.mubr.bf16.mxu0 %v230
    %864 = vmatmul.mubr.bf16.gmra.mxu0 %v223
    %v865 = vpop.f32.mrf.mxu0
    %v866 = vadd.f32 %v204, %v865
    %v867 = vpop.f32.mrf.mxu0
    %v868 = vpop.f32.mrf.mxu0
    %v869 = vpop.f32.mrf.mxu0
    %870 = vdwg.mxu0
    %871 = vmatprep.subr.bf16.mxu0 0
    %872 = vmatpush1.bf16.msra.mxu0 %v628
    %873 = vmatprep.subr.bf16.mxu0 0
    %874 = vmatpush1.bf16.msra.mxu0 %v625
    %875 = vmatprep.subr.bf16.mxu0 0
    %876 = vmatpush1.bf16.msra.mxu0 %v622
    %877 = vmatprep.subr.bf16.mxu0 0
    %878 = vmatpush1.bf16.msra.mxu0 %v619
    %879 = vmatprep.subr.bf16.mxu0 0
    %880 = vmatpush1.bf16.msra.mxu0 %v616
    %881 = vmatprep.subr.bf16.mxu0 0
    %882 = vmatpush1.bf16.msra.mxu0 %v613
    %883 = vmatprep.subr.bf16.mxu0 0
    %884 = vmatpush1.bf16.msra.mxu0 %v610
    %885 = vmatprep.subr.bf16.mxu0 0
    %886 = vmatpush1.bf16.msra.mxu0 %v607
    %887 = vmatprep.subr.bf16.mxu0 0
    %888 = vmatpush2.bf16.msra.mxu0 %v652
    %889 = vmatprep.subr.bf16.mxu0 0
    %890 = vmatpush2.bf16.msra.mxu0 %v649
    %891 = vmatprep.subr.bf16.mxu0 0
    %892 = vmatpush2.bf16.msra.mxu0 %v646
    %893 = vmatprep.subr.bf16.mxu0 0
    %894 = vmatpush2.bf16.msra.mxu0 %v643
    %895 = vmatprep.subr.bf16.mxu0 0
    %896 = vmatpush2.bf16.msra.mxu0 %v640
    %897 = vmatprep.subr.bf16.mxu0 0
    %898 = vmatpush2.bf16.msra.mxu0 %v637
    %899 = vmatprep.subr.bf16.mxu0 0
    %900 = vmatpush2.bf16.msra.mxu0 %v634
    %901 = vmatprep.subr.bf16.mxu0 0
    %902 = vmatpush2.bf16.msra.mxu0 %v631
    %903 = vmatprep.mubr.bf16.mxu0 %v232
    %904 = vmatmul.mubr.bf16.gmra.mxu0 %v231
    %v905 = vpop.f32.mrf.mxu0
    %v906 = vadd.f32 %v866, %v905
    %v907 = vpop.f32.mrf.mxu0
    %v908 = vpop.f32.mrf.mxu0
    %v909 = vpop.f32.mrf.mxu0
    %910 = vdwg.mxu0
    %v911 = vmax.f32 %v825, 0.0
    %v912 = vmax.f32 %v827, 0.0
    %v913 = vmax.f32 %v906, 0.0
    %v914 = vpack.c.bf16 %v911, %v911
    %v915 = vpack.c.bf16 %v912, %v912
    %v916 = vpack.c.bf16 %v913, %v913
    %v917 = vld [vmem:[#allocation5] sm:$0xff]
    %v918 = vld [vmem:[#allocation5 + $0x8] sm:$0xff]
    %v919 = vld [vmem:[#allocation5 + $0x10] sm:$0xff]
    %v920 = vld [vmem:[#allocation5 + $0x18] sm:$0xff]
    %v921 = vld [vmem:[#allocation5 + $0x20] sm:$0xff]
    %v922 = vld [vmem:[#allocation5 + $0x28] sm:$0xff]
    %v923 = vld [vmem:[#allocation5 + $0x30] sm:$0xff]
    %v924 = vld [vmem:[#allocation5 + $0x38] sm:$0xff]
    %v925 = vld [vmem:[#allocation5 + $0x40] sm:$0xff]
    %v926 = vld [vmem:[#allocation5 + $0x48] sm:$0xff]
    %v927 = vld [vmem:[#allocation5 + $0x50] sm:$0xff]
    %v928 = vld [vmem:[#allocation5 + $0x58] sm:$0xff]
    %v929 = vld [vmem:[#allocation5 + $0x60] sm:$0xff]
    %v930 = vld [vmem:[#allocation5 + $0x68] sm:$0xff]
    %v931 = vld [vmem:[#allocation5 + $0x70] sm:$0xff]
    %v932 = vld [vmem:[#allocation5 + $0x78] sm:$0xff]
    %v933 = vld [vmem:[#allocation5 + $0x80] sm:$0xff]
    %v934 = vld [vmem:[#allocation5 + $0x88] sm:$0xff]
    %v935 = vld [vmem:[#allocation5 + $0x90] sm:$0xff]
    %v936 = vld [vmem:[#allocation5 + $0x98] sm:$0xff]
    %v937 = vld [vmem:[#allocation5 + $0xa0] sm:$0xff]
    %v938 = vld [vmem:[#allocation5 + $0xa8] sm:$0xff]
    %v939 = vld [vmem:[#allocation5 + $0xb0] sm:$0xff]
    %v940 = vld [vmem:[#allocation5 + $0xb8] sm:$0xff]
    %v941 = vld [vmem:[#allocation5 + $0xc0] sm:$0xff]
    %v942 = vld [vmem:[#allocation5 + $0xc8] sm:$0xff]
    %v943 = vld [vmem:[#allocation5 + $0xd0] sm:$0xff]
    %v944 = vld [vmem:[#allocation5 + $0xd8] sm:$0xff]
    %v945 = vld [vmem:[#allocation5 + $0xe0] sm:$0xff]
    %v946 = vld [vmem:[#allocation5 + $0xe8] sm:$0xff]
    %v947 = vld [vmem:[#allocation5 + $0xf0] sm:$0xff]
    %v948 = vld [vmem:[#allocation5 + $0xf8] sm:$0xff]
    %v949 = vld [vmem:[#allocation5 + $0x100] sm:$0xff]
    %v950 = vld [vmem:[#allocation5 + $0x108] sm:$0xff]
    %v951 = vld [vmem:[#allocation5 + $0x110] sm:$0xff]
    %v952 = vld [vmem:[#allocation5 + $0x118] sm:$0xff]
    %v953 = vld [vmem:[#allocation5 + $0x120] sm:$0xff]
    %v954 = vld [vmem:[#allocation5 + $0x128] sm:$0xff]
    %v955 = vld [vmem:[#allocation5 + $0x130] sm:$0xff]
    %v956 = vld [vmem:[#allocation5 + $0x138] sm:$0xff]
    %v957 = vld [vmem:[#allocation5 + $0x140] sm:$0xff]
    %v958 = vld [vmem:[#allocation5 + $0x148] sm:$0xff]
    %v959 = vld [vmem:[#allocation5 + $0x150] sm:$0xff]
    %v960 = vld [vmem:[#allocation5 + $0x158] sm:$0xff]
    %v961 = vld [vmem:[#allocation5 + $0x160] sm:$0xff]
    %v962 = vld [vmem:[#allocation5 + $0x168] sm:$0xff]
    %v963 = vld [vmem:[#allocation5 + $0x170] sm:$0xff]
    %v964 = vld [vmem:[#allocation5 + $0x178] sm:$0xff]
    %v965 = vld [vmem:[%s1] sm:$0x1]
    %v966 = vld [vmem:[%s4] sm:$0xff]
    %v968 = vunpack.c.l.b16 %v966
    %v969 = vunpack.c.h.b16 %v966
    %v970 = vpack.c.b16 %v968, %v968
    %v971 = vpack.c.b16 %v969, %v969
    %vm972 = vcmask 64512
    %v974 = vsel %vm972, %v965, 0
    %vm976 = vcmask 1043456
    %v978 = vsel %vm976, %v970, 0
    %v981 = vsel %vm976, %v971, 0
    %983 = vmatprep.subr.bf16.mxu0 0
    %984 = vmatpush1.bf16.msra.mxu0 0
    %985 = vmatprep.subr.bf16.mxu0 0
    %986 = vmatpush1.bf16.msra.mxu0 0
    %987 = vmatprep.subr.bf16.mxu0 0
    %988 = vmatpush1.bf16.msra.mxu0 0
    %989 = vmatprep.subr.bf16.mxu0 0
    %990 = vmatpush1.bf16.msra.mxu0 0
    %991 = vmatprep.subr.bf16.mxu0 0
    %992 = vmatpush1.bf16.msra.mxu0 0
    %993 = vmatprep.subr.bf16.mxu0 0
    %994 = vmatpush1.bf16.msra.mxu0 0
    %995 = vmatprep.subr.bf16.mxu0 0
    %996 = vmatpush1.bf16.msra.mxu0 0
    %997 = vmatprep.subr.bf16.mxu0 %v981
    %998 = vmatpush1.bf16.msra.mxu0 %v978
    %999 = vmatprep.subr.bf16.mxu0 0
    %1000 = vmatpush2.bf16.msra.mxu0 0
    %1001 = vmatprep.subr.bf16.mxu0 0
    %1002 = vmatpush2.bf16.msra.mxu0 0
    %1003 = vmatprep.subr.bf16.mxu0 0
    %1004 = vmatpush2.bf16.msra.mxu0 0
    %1005 = vmatprep.subr.bf16.mxu0 0
    %1006 = vmatpush2.bf16.msra.mxu0 0
    %1007 = vmatprep.subr.bf16.mxu0 0
    %1008 = vmatpush2.bf16.msra.mxu0 0
    %1009 = vmatprep.subr.bf16.mxu0 0
    %1010 = vmatpush2.bf16.msra.mxu0 0
    %1011 = vmatprep.subr.bf16.mxu0 0
    %1012 = vmatpush2.bf16.msra.mxu0 0
    %1013 = vmatprep.subr.bf16.mxu0 0
    %1014 = vmatpush2.bf16.msra.mxu0 0
    %1015 = vmatprep.mubr.bf16.mxu0 0
    %1016 = vmatmul.mubr.bf16.gmra.mxu0 %v974
    %v1017 = vpop.f32.mrf.mxu0
    %v1018 = vadd.f32 0.0, %v1017
    %v1019 = vpop.f32.mrf.mxu0
    %v1020 = vadd.f32 0.0, %v1019
    %v1021 = vpop.f32.mrf.mxu0
    %v1022 = vpop.f32.mrf.mxu0
    %1023 = vdwg.mxu0
    %v1072 = vunpack.c.l.b16 %v917
    %v1073 = vunpack.c.h.b16 %v917
    %v1074 = vunpack.c.l.b16 %v918
    %v1075 = vunpack.c.h.b16 %v918
    %v1076 = vunpack.c.l.b16 %v919
    %v1077 = vunpack.c.h.b16 %v919
    %v1078 = vunpack.c.l.b16 %v920
    %v1079 = vunpack.c.h.b16 %v920
    %v1080 = vunpack.c.l.b16 %v921
    %v1081 = vunpack.c.h.b16 %v921
    %v1082 = vunpack.c.l.b16 %v922
    %v1083 = vunpack.c.h.b16 %v922
    %v1084 = vunpack.c.l.b16 %v923
    %v1085 = vunpack.c.h.b16 %v923
    %v1086 = vunpack.c.l.b16 %v924
    %v1087 = vunpack.c.h.b16 %v924
    %v1088 = vunpack.c.l.b16 %v925
    %v1089 = vunpack.c.h.b16 %v925
    %v1090 = vunpack.c.l.b16 %v926
    %v1091 = vunpack.c.h.b16 %v926
    %v1092 = vunpack.c.l.b16 %v927
    %v1093 = vunpack.c.h.b16 %v927
    %v1094 = vunpack.c.l.b16 %v928
    %v1095 = vunpack.c.h.b16 %v928
    %v1096 = vunpack.c.l.b16 %v929
    %v1097 = vunpack.c.h.b16 %v929
    %v1098 = vunpack.c.l.b16 %v930
    %v1099 = vunpack.c.h.b16 %v930
    %v1100 = vunpack.c.l.b16 %v931
    %v1101 = vunpack.c.h.b16 %v931
    %v1102 = vunpack.c.l.b16 %v932
    %v1103 = vunpack.c.h.b16 %v932
    %v1104 = vunpack.c.l.b16 %v933
    %v1105 = vunpack.c.h.b16 %v933
    %v1106 = vunpack.c.l.b16 %v934
    %v1107 = vunpack.c.h.b16 %v934
    %v1108 = vunpack.c.l.b16 %v935
    %v1109 = vunpack.c.h.b16 %v935
    %v1110 = vunpack.c.l.b16 %v936
    %v1111 = vunpack.c.h.b16 %v936
    %v1112 = vunpack.c.l.b16 %v937
    %v1113 = vunpack.c.h.b16 %v937
    %v1114 = vunpack.c.l.b16 %v938
    %v1115 = vunpack.c.h.b16 %v938
    %v1116 = vunpack.c.l.b16 %v939
    %v1117 = vunpack.c.h.b16 %v939
    %v1118 = vunpack.c.l.b16 %v940
    %v1119 = vunpack.c.h.b16 %v940
    %v1120 = vunpack.c.l.b16 %v941
    %v1121 = vunpack.c.h.b16 %v941
    %v1122 = vunpack.c.l.b16 %v942
    %v1123 = vunpack.c.h.b16 %v942
    %v1124 = vunpack.c.l.b16 %v943
    %v1125 = vunpack.c.h.b16 %v943
    %v1126 = vunpack.c.l.b16 %v944
    %v1127 = vunpack.c.h.b16 %v944
    %v1128 = vunpack.c.l.b16 %v945
    %v1129 = vunpack.c.h.b16 %v945
    %v1130 = vunpack.c.l.b16 %v946
    %v1131 = vunpack.c.h.b16 %v946
    %v1132 = vunpack.c.l.b16 %v947
    %v1133 = vunpack.c.h.b16 %v947
    %v1134 = vunpack.c.l.b16 %v948
    %v1135 = vunpack.c.h.b16 %v948
    %v1136 = vunpack.c.l.b16 %v949
    %v1137 = vunpack.c.h.b16 %v949
    %v1138 = vunpack.c.l.b16 %v950
    %v1139 = vunpack.c.h.b16 %v950
    %v1140 = vunpack.c.l.b16 %v951
    %v1141 = vunpack.c.h.b16 %v951
    %v1142 = vunpack.c.l.b16 %v952
    %v1143 = vunpack.c.h.b16 %v952
    %v1144 = vunpack.c.l.b16 %v953
    %v1145 = vunpack.c.h.b16 %v953
    %v1146 = vunpack.c.l.b16 %v954
    %v1147 = vunpack.c.h.b16 %v954
    %v1148 = vunpack.c.l.b16 %v955
    %v1149 = vunpack.c.h.b16 %v955
    %v1150 = vunpack.c.l.b16 %v956
    %v1151 = vunpack.c.h.b16 %v956
    %v1152 = vunpack.c.l.b16 %v957
    %v1153 = vunpack.c.h.b16 %v957
    %v1154 = vunpack.c.l.b16 %v958
    %v1155 = vunpack.c.h.b16 %v958
    %v1156 = vunpack.c.l.b16 %v959
    %v1157 = vunpack.c.h.b16 %v959
    %v1158 = vunpack.c.l.b16 %v960
    %v1159 = vunpack.c.h.b16 %v960
    %v1160 = vunpack.c.l.b16 %v961
    %v1161 = vunpack.c.h.b16 %v961
    %v1162 = vunpack.c.l.b16 %v962
    %v1163 = vunpack.c.h.b16 %v962
    %v1164 = vunpack.c.l.b16 %v963
    %v1165 = vunpack.c.h.b16 %v963
    %v1166 = vunpack.c.l.b16 %v964
    %v1167 = vunpack.c.h.b16 %v964
    %v1168 = vpack.c.b16 %v1074, %v1072
    %v1169 = vpack.c.b16 %v1075, %v1073
    %v1170 = vpack.c.b16 %v1078, %v1076
    %v1171 = vpack.c.b16 %v1079, %v1077
    %v1172 = vpack.c.b16 %v1082, %v1080
    %v1173 = vpack.c.b16 %v1083, %v1081
    %v1174 = vpack.c.b16 %v1086, %v1084
    %v1175 = vpack.c.b16 %v1087, %v1085
    %v1176 = vpack.c.b16 %v1090, %v1088
    %v1177 = vpack.c.b16 %v1091, %v1089
    %v1178 = vpack.c.b16 %v1094, %v1092
    %v1179 = vpack.c.b16 %v1095, %v1093
    %v1180 = vpack.c.b16 %v1098, %v1096
    %v1181 = vpack.c.b16 %v1099, %v1097
    %v1182 = vpack.c.b16 %v1102, %v1100
    %v1183 = vpack.c.b16 %v1103, %v1101
    %v1184 = vpack.c.b16 %v1106, %v1104
    %v1185 = vpack.c.b16 %v1107, %v1105
    %v1186 = vpack.c.b16 %v1110, %v1108
    %v1187 = vpack.c.b16 %v1111, %v1109
    %v1188 = vpack.c.b16 %v1114, %v1112
    %v1189 = vpack.c.b16 %v1115, %v1113
    %v1190 = vpack.c.b16 %v1118, %v1116
    %v1191 = vpack.c.b16 %v1119, %v1117
    %v1192 = vpack.c.b16 %v1122, %v1120
    %v1193 = vpack.c.b16 %v1123, %v1121
    %v1194 = vpack.c.b16 %v1126, %v1124
    %v1195 = vpack.c.b16 %v1127, %v1125
    %v1196 = vpack.c.b16 %v1130, %v1128
    %v1197 = vpack.c.b16 %v1131, %v1129
    %v1198 = vpack.c.b16 %v1134, %v1132
    %v1199 = vpack.c.b16 %v1135, %v1133
    %v1200 = vpack.c.b16 %v1138, %v1136
    %v1201 = vpack.c.b16 %v1139, %v1137
    %v1202 = vpack.c.b16 %v1142, %v1140
    %v1203 = vpack.c.b16 %v1143, %v1141
    %v1204 = vpack.c.b16 %v1146, %v1144
    %v1205 = vpack.c.b16 %v1147, %v1145
    %v1206 = vpack.c.b16 %v1150, %v1148
    %v1207 = vpack.c.b16 %v1151, %v1149
    %v1208 = vpack.c.b16 %v1154, %v1152
    %v1209 = vpack.c.b16 %v1155, %v1153
    %v1210 = vpack.c.b16 %v1158, %v1156
    %v1211 = vpack.c.b16 %v1159, %v1157
    %v1212 = vpack.c.b16 %v1162, %v1160
    %v1213 = vpack.c.b16 %v1163, %v1161
    %v1214 = vpack.c.b16 %v1166, %v1164
    %v1215 = vpack.c.b16 %v1167, %v1165
    %1264 = vmatprep.subr.bf16.mxu0 %v1183
    %1265 = vmatpush1.bf16.msra.mxu0 %v1182
    %1266 = vmatprep.subr.bf16.mxu0 %v1181
    %1267 = vmatpush1.bf16.msra.mxu0 %v1180
    %1268 = vmatprep.subr.bf16.mxu0 %v1179
    %1269 = vmatpush1.bf16.msra.mxu0 %v1178
    %1270 = vmatprep.subr.bf16.mxu0 %v1177
    %1271 = vmatpush1.bf16.msra.mxu0 %v1176
    %1272 = vmatprep.subr.bf16.mxu0 %v1175
    %1273 = vmatpush1.bf16.msra.mxu0 %v1174
    %1274 = vmatprep.subr.bf16.mxu0 %v1173
    %1275 = vmatpush1.bf16.msra.mxu0 %v1172
    %1276 = vmatprep.subr.bf16.mxu0 %v1171
    %1277 = vmatpush1.bf16.msra.mxu0 %v1170
    %1278 = vmatprep.subr.bf16.mxu0 %v1169
    %1279 = vmatpush1.bf16.msra.mxu0 %v1168
    %1280 = vmatprep.subr.bf16.mxu0 %v1199
    %1281 = vmatpush2.bf16.msra.mxu0 %v1198
    %1282 = vmatprep.subr.bf16.mxu0 %v1197
    %1283 = vmatpush2.bf16.msra.mxu0 %v1196
    %1284 = vmatprep.subr.bf16.mxu0 %v1195
    %1285 = vmatpush2.bf16.msra.mxu0 %v1194
    %1286 = vmatprep.subr.bf16.mxu0 %v1193
    %1287 = vmatpush2.bf16.msra.mxu0 %v1192
    %1288 = vmatprep.subr.bf16.mxu0 %v1191
    %1289 = vmatpush2.bf16.msra.mxu0 %v1190
    %1290 = vmatprep.subr.bf16.mxu0 %v1189
    %1291 = vmatpush2.bf16.msra.mxu0 %v1188
    %1292 = vmatprep.subr.bf16.mxu0 %v1187
    %1293 = vmatpush2.bf16.msra.mxu0 %v1186
    %1294 = vmatprep.subr.bf16.mxu0 %v1185
    %1295 = vmatpush2.bf16.msra.mxu0 %v1184
    %1296 = vmatprep.mubr.bf16.mxu0 %v915
    %1297 = vmatmul.mubr.bf16.gmra.mxu0 %v914
    %v1298 = vpop.f32.mrf.mxu0
    %v1299 = vadd.f32 %v1018, %v1298
    %v1300 = vpop.f32.mrf.mxu0
    %v1301 = vadd.f32 %v1020, %v1300
    %v1302 = vpop.f32.mrf.mxu0
    %v1303 = vpop.f32.mrf.mxu0
    %1304 = vdwg.mxu0
    %1305 = vmatprep.subr.bf16.mxu0 %v1215
    %1306 = vmatpush1.bf16.msra.mxu0 %v1214
    %1307 = vmatprep.subr.bf16.mxu0 %v1213
    %1308 = vmatpush1.bf16.msra.mxu0 %v1212
    %1309 = vmatprep.subr.bf16.mxu0 %v1211
    %1310 = vmatpush1.bf16.msra.mxu0 %v1210
    %1311 = vmatprep.subr.bf16.mxu0 %v1209
    %1312 = vmatpush1.bf16.msra.mxu0 %v1208
    %1313 = vmatprep.subr.bf16.mxu0 %v1207
    %1314 = vmatpush1.bf16.msra.mxu0 %v1206
    %1315 = vmatprep.subr.bf16.mxu0 %v1205
    %1316 = vmatpush1.bf16.msra.mxu0 %v1204
    %1317 = vmatprep.subr.bf16.mxu0 %v1203
    %1318 = vmatpush1.bf16.msra.mxu0 %v1202
    %1319 = vmatprep.subr.bf16.mxu0 %v1201
    %1320 = vmatpush1.bf16.msra.mxu0 %v1200
    %1321 = vmatprep.subr.bf16.mxu0 0
    %1322 = vmatpush2.bf16.msra.mxu0 0
    %1323 = vmatprep.subr.bf16.mxu0 0
    %1324 = vmatpush2.bf16.msra.mxu0 0
    %1325 = vmatprep.subr.bf16.mxu0 0
    %1326 = vmatpush2.bf16.msra.mxu0 0
    %1327 = vmatprep.subr.bf16.mxu0 0
    %1328 = vmatpush2.bf16.msra.mxu0 0
    %1329 = vmatprep.subr.bf16.mxu0 0
    %1330 = vmatpush2.bf16.msra.mxu0 0
    %1331 = vmatprep.subr.bf16.mxu0 0
    %1332 = vmatpush2.bf16.msra.mxu0 0
    %1333 = vmatprep.subr.bf16.mxu0 0
    %1334 = vmatpush2.bf16.msra.mxu0 0
    %1335 = vmatprep.subr.bf16.mxu0 0
    %1336 = vmatpush2.bf16.msra.mxu0 0
    %1337 = vmatprep.mubr.bf16.mxu0 0
    %1338 = vmatmul.mubr.bf16.gmra.mxu0 %v916
    %v1339 = vpop.f32.mrf.mxu0
    %v1340 = vadd.f32 %v1299, %v1339
    %v1341 = vpop.f32.mrf.mxu0
    %v1342 = vadd.f32 %v1301, %v1341
    %v1343 = vpop.f32.mrf.mxu0
    %v1344 = vpop.f32.mrf.mxu0
    %1345 = vdwg.mxu0
    %v1347 = vlaneseq
    %v1348 = vshrl.u32 %v1347, 7
    %v1349 = vsub.s32 0, %v1348
    %v1350 = vrot.slane %v60, %v1349
    %v1351 = vlaneseq
    %v1352 = vshrl.u32 %v1351, 7
    %v1353 = vsub.s32 1, %v1352
    %v1354 = vrot.slane %v60, %v1353
    %v1357 = vadd.f32 %v1340, %v1350
    %v1358 = vadd.f32 %v1342, %v1354
    %v1359 = vmax.f32 %v1357, 0.0
    %v1360 = vmax.f32 %v1358, 0.0
    %v1361 = vpack.c.bf16 %v1359, %v1359
    %v1362 = vpack.c.bf16 %v1360, %v1360
    %v1363 = vld [vmem:[%s5] sm:$0xf]
    %v1364 = vld [vmem:[%s5 + $0x4] sm:$0xf]
    %v1365 = vld [vmem:[%s5 + $0x8] sm:$0xf]
    %v1366 = vld [vmem:[%s5 + $0xc] sm:$0xf]
    %v1367 = vld [vmem:[%s5 + $0x10] sm:$0xf]
    %v1368 = vld [vmem:[%s5 + $0x14] sm:$0xf]
    %v1369 = vld [vmem:[%s5 + $0x18] sm:$0xf]
    %v1370 = vld [vmem:[%s5 + $0x1c] sm:$0xf]
    %v1371 = vld [vmem:[%s5 + $0x20] sm:$0xf]
    %v1372 = vld [vmem:[%s5 + $0x24] sm:$0xf]
    %v1373 = vld [vmem:[%s5 + $0x28] sm:$0xf]
    %v1374 = vld [vmem:[%s5 + $0x2c] sm:$0xf]
    %v1375 = vld [vmem:[%s5 + $0x30] sm:$0xf]
    %v1376 = vld [vmem:[%s5 + $0x34] sm:$0xf]
    %v1377 = vld [vmem:[%s5 + $0x38] sm:$0xf]
    %v1378 = vld [vmem:[%s5 + $0x3c] sm:$0xf]
    %v1379 = vld [vmem:[%s5 + $0x40] sm:$0xf]
    %v1380 = vld [vmem:[%s5 + $0x44] sm:$0xf]
    %v1381 = vld [vmem:[%s5 + $0x48] sm:$0xf]
    %v1382 = vld [vmem:[%s5 + $0x4c] sm:$0xf]
    %v1383 = vld [vmem:[%s5 + $0x50] sm:$0xf]
    %v1384 = vld [vmem:[%s5 + $0x54] sm:$0xf]
    %v1385 = vld [vmem:[%s5 + $0x58] sm:$0xf]
    %v1386 = vld [vmem:[%s5 + $0x5c] sm:$0xf]
    %v1387 = vld [vmem:[%s5 + $0x60] sm:$0xf]
    %v1388 = vld [vmem:[%s5 + $0x64] sm:$0xf]
    %v1389 = vld [vmem:[%s5 + $0x68] sm:$0xf]
    %v1390 = vld [vmem:[%s5 + $0x6c] sm:$0xf]
    %v1391 = vld [vmem:[%s5 + $0x70] sm:$0xf]
    %v1392 = vld [vmem:[%s5 + $0x74] sm:$0xf]
    %v1393 = vld [vmem:[%s5 + $0x78] sm:$0xf]
    %v1394 = vld [vmem:[%s5 + $0x7c] sm:$0xf]
    %v1396 = vlaneseq
    %v1397 = vshrl.u32 %v1396, 7
    %v1398 = vsub.s32 0, %v1397
    %v1399 = vrot.slane %v61, %v1398
    %v1433 = vunpack.c.l.b16 %v1363
    %v1434 = vunpack.c.l.b16 %v1364
    %v1435 = vunpack.c.l.b16 %v1365
    %v1436 = vunpack.c.l.b16 %v1366
    %v1437 = vunpack.c.l.b16 %v1367
    %v1438 = vunpack.c.l.b16 %v1368
    %v1439 = vunpack.c.l.b16 %v1369
    %v1440 = vunpack.c.l.b16 %v1370
    %v1441 = vunpack.c.l.b16 %v1371
    %v1442 = vunpack.c.l.b16 %v1372
    %v1443 = vunpack.c.l.b16 %v1373
    %v1444 = vunpack.c.l.b16 %v1374
    %v1445 = vunpack.c.l.b16 %v1375
    %v1446 = vunpack.c.l.b16 %v1376
    %v1447 = vunpack.c.l.b16 %v1377
    %v1448 = vunpack.c.l.b16 %v1378
    %v1449 = vunpack.c.l.b16 %v1379
    %v1450 = vunpack.c.l.b16 %v1380
    %v1451 = vunpack.c.l.b16 %v1381
    %v1452 = vunpack.c.l.b16 %v1382
    %v1453 = vunpack.c.l.b16 %v1383
    %v1454 = vunpack.c.l.b16 %v1384
    %v1455 = vunpack.c.l.b16 %v1385
    %v1456 = vunpack.c.l.b16 %v1386
    %v1457 = vunpack.c.l.b16 %v1387
    %v1458 = vunpack.c.l.b16 %v1388
    %v1459 = vunpack.c.l.b16 %v1389
    %v1460 = vunpack.c.l.b16 %v1390
    %v1461 = vunpack.c.l.b16 %v1391
    %v1462 = vunpack.c.l.b16 %v1392
    %v1463 = vunpack.c.l.b16 %v1393
    %v1464 = vunpack.c.l.b16 %v1394
    %v1465 = vpack.c.b16 %v1434, %v1433
    %v1466 = vpack.c.b16 %v1436, %v1435
    %v1467 = vpack.c.b16 %v1438, %v1437
    %v1468 = vpack.c.b16 %v1440, %v1439
    %v1469 = vpack.c.b16 %v1442, %v1441
    %v1470 = vpack.c.b16 %v1444, %v1443
    %v1471 = vpack.c.b16 %v1446, %v1445
    %v1472 = vpack.c.b16 %v1448, %v1447
    %v1473 = vpack.c.b16 %v1450, %v1449
    %v1474 = vpack.c.b16 %v1452, %v1451
    %v1475 = vpack.c.b16 %v1454, %v1453
    %v1476 = vpack.c.b16 %v1456, %v1455
    %v1477 = vpack.c.b16 %v1458, %v1457
    %v1478 = vpack.c.b16 %v1460, %v1459
    %v1479 = vpack.c.b16 %v1462, %v1461
    %v1480 = vpack.c.b16 %v1464, %v1463
    %1497 = vmatprep.subr.bf16.mxu0 0
    %1498 = vmatpush1.bf16.msra.mxu0 %v1472
    %1499 = vmatprep.subr.bf16.mxu0 0
    %1500 = vmatpush1.bf16.msra.mxu0 %v1471
    %1501 = vmatprep.subr.bf16.mxu0 0
    %1502 = vmatpush1.bf16.msra.mxu0 %v1470
    %1503 = vmatprep.subr.bf16.mxu0 0
    %1504 = vmatpush1.bf16.msra.mxu0 %v1469
    %1505 = vmatprep.subr.bf16.mxu0 0
    %1506 = vmatpush1.bf16.msra.mxu0 %v1468
    %1507 = vmatprep.subr.bf16.mxu0 0
    %1508 = vmatpush1.bf16.msra.mxu0 %v1467
    %1509 = vmatprep.subr.bf16.mxu0 0
    %1510 = vmatpush1.bf16.msra.mxu0 %v1466
    %1511 = vmatprep.subr.bf16.mxu0 0
    %1512 = vmatpush1.bf16.msra.mxu0 %v1465
    %1513 = vmatprep.subr.bf16.mxu0 0
    %1514 = vmatpush2.bf16.msra.mxu0 %v1480
    %1515 = vmatprep.subr.bf16.mxu0 0
    %1516 = vmatpush2.bf16.msra.mxu0 %v1479
    %1517 = vmatprep.subr.bf16.mxu0 0
    %1518 = vmatpush2.bf16.msra.mxu0 %v1478
    %1519 = vmatprep.subr.bf16.mxu0 0
    %1520 = vmatpush2.bf16.msra.mxu0 %v1477
    %1521 = vmatprep.subr.bf16.mxu0 0
    %1522 = vmatpush2.bf16.msra.mxu0 %v1476
    %1523 = vmatprep.subr.bf16.mxu0 0
    %1524 = vmatpush2.bf16.msra.mxu0 %v1475
    %1525 = vmatprep.subr.bf16.mxu0 0
    %1526 = vmatpush2.bf16.msra.mxu0 %v1474
    %1527 = vmatprep.subr.bf16.mxu0 0
    %1528 = vmatpush2.bf16.msra.mxu0 %v1473
    %1529 = vmatprep.mubr.bf16.mxu0 %v1362
    %1530 = vmatmul.mubr.bf16.gmra.mxu0 %v1361
    %v1531 = vpop.f32.mrf.mxu0
    %v1532 = vadd.f32 %v1399, %v1531
    %v1533 = vpop.f32.mrf.mxu0
    %v1534 = vpop.f32.mrf.mxu0
    %v1535 = vpop.f32.mrf.mxu0
    %1536 = vdwg.mxu0
    %v1537 = vmax.f32 %v1532, 0.0
    %v1538 = vpack.c.bf16 %v1537, %v1537
    %v1539 = vld [vmem:[%s6] sm:$0xf]
    %v1540 = vld [vmem:[%s6 + $0x4] sm:$0xf]
    %v1541 = vld [vmem:[%s6 + $0x8] sm:$0xf]
    %v1542 = vld [vmem:[%s6 + $0xc] sm:$0xf]
    %v1543 = vld [vmem:[%s6 + $0x10] sm:$0xf]
    %v1544 = vld [vmem:[%s6 + $0x14] sm:$0xf]
    %v1545 = vld [vmem:[%s6 + $0x18] sm:$0xf]
    %v1546 = vld [vmem:[%s6 + $0x1c] sm:$0xf]
    %v1547 = vld [vmem:[%s6 + $0x20] sm:$0xf]
    %v1548 = vld [vmem:[%s6 + $0x24] sm:$0xf]
    %v1549 = vld [vmem:[%s6 + $0x28] sm:$0xf]
    %v1550 = vld [vmem:[%s6 + $0x2c] sm:$0xf]
    %v1551 = vld [vmem:[%s6 + $0x30] sm:$0xf]
    %v1552 = vld [vmem:[%s6 + $0x34] sm:$0xf]
    %v1553 = vld [vmem:[%s6 + $0x38] sm:$0xf]
    %v1554 = vld [vmem:[%s6 + $0x3c] sm:$0xf]
    %v1556 = vlaneseq
    %v1557 = vshrl.u32 %v1556, 7
    %v1558 = vsub.s32 0, %v1557
    %v1559 = vrot.slane %v62, %v1558
    %v1577 = vunpack.c.l.b16 %v1539
    %v1578 = vunpack.c.l.b16 %v1540
    %v1579 = vunpack.c.l.b16 %v1541
    %v1580 = vunpack.c.l.b16 %v1542
    %v1581 = vunpack.c.l.b16 %v1543
    %v1582 = vunpack.c.l.b16 %v1544
    %v1583 = vunpack.c.l.b16 %v1545
    %v1584 = vunpack.c.l.b16 %v1546
    %v1585 = vunpack.c.l.b16 %v1547
    %v1586 = vunpack.c.l.b16 %v1548
    %v1587 = vunpack.c.l.b16 %v1549
    %v1588 = vunpack.c.l.b16 %v1550
    %v1589 = vunpack.c.l.b16 %v1551
    %v1590 = vunpack.c.l.b16 %v1552
    %v1591 = vunpack.c.l.b16 %v1553
    %v1592 = vunpack.c.l.b16 %v1554
    %v1593 = vpack.c.b16 %v1578, %v1577
    %v1594 = vpack.c.b16 %v1580, %v1579
    %v1595 = vpack.c.b16 %v1582, %v1581
    %v1596 = vpack.c.b16 %v1584, %v1583
    %v1597 = vpack.c.b16 %v1586, %v1585
    %v1598 = vpack.c.b16 %v1588, %v1587
    %v1599 = vpack.c.b16 %v1590, %v1589
    %v1600 = vpack.c.b16 %v1592, %v1591
    %1609 = vmatprep.subr.bf16.mxu0 0
    %1610 = vmatpush1.bf16.msra.mxu0 %v1600
    %1611 = vmatprep.subr.bf16.mxu0 0
    %1612 = vmatpush1.bf16.msra.mxu0 %v1599
    %1613 = vmatprep.subr.bf16.mxu0 0
    %1614 = vmatpush1.bf16.msra.mxu0 %v1598
    %1615 = vmatprep.subr.bf16.mxu0 0
    %1616 = vmatpush1.bf16.msra.mxu0 %v1597
    %1617 = vmatprep.subr.bf16.mxu0 0
    %1618 = vmatpush1.bf16.msra.mxu0 %v1596
    %1619 = vmatprep.subr.bf16.mxu0 0
    %1620 = vmatpush1.bf16.msra.mxu0 %v1595
    %1621 = vmatprep.subr.bf16.mxu0 0
    %1622 = vmatpush1.bf16.msra.mxu0 %v1594
    %1623 = vmatprep.subr.bf16.mxu0 0
    %1624 = vmatpush1.bf16.msra.mxu0 %v1593
    %1625 = vmatprep.subr.bf16.mxu0 0
    %1626 = vmatpush2.bf16.msra.mxu0 0
    %1627 = vmatprep.subr.bf16.mxu0 0
    %1628 = vmatpush2.bf16.msra.mxu0 0
    %1629 = vmatprep.subr.bf16.mxu0 0
    %1630 = vmatpush2.bf16.msra.mxu0 0
    %1631 = vmatprep.subr.bf16.mxu0 0
    %1632 = vmatpush2.bf16.msra.mxu0 0
    %1633 = vmatprep.subr.bf16.mxu0 0
    %1634 = vmatpush2.bf16.msra.mxu0 0
    %1635 = vmatprep.subr.bf16.mxu0 0
    %1636 = vmatpush2.bf16.msra.mxu0 0
    %1637 = vmatprep.subr.bf16.mxu0 0
    %1638 = vmatpush2.bf16.msra.mxu0 0
    %1639 = vmatprep.subr.bf16.mxu0 0
    %1640 = vmatpush2.bf16.msra.mxu0 0
    %1641 = vmatprep.mubr.bf16.mxu0 0
    %1642 = vmatmul.mubr.bf16.gmra.mxu0 %v1538
    %v1643 = vpop.f32.mrf.mxu0
    %v1644 = vadd.f32 %v1559, %v1643
    %v1645 = vpop.f32.mrf.mxu0
    %v1646 = vpop.f32.mrf.mxu0
    %v1647 = vpop.f32.mrf.mxu0
    %1648 = vdwg.mxu0
    %v1649 = vmax.f32 %v1644, 0.0
    %v1650 = vand.u32 2147483647, %v1644
    %v1651 = vsub.f32 0.0, %v1650
    %v1652 = vmul.f32 %v1651, 1.442695
    %v1653 = vpow.pop %v1652
    %v1654 = vadd.f32 %v1653, 1.0
    %v1655 = vlog2.pop %v1654
    %v1656 = vmul.f32 %v1655, 0.6931472
    %v1657 = vmul.f32 -0.5, %v1653
    %v1658 = vadd.f32 %v1657, 1.0
    %v1659 = vmul.f32 %v1658, %v1653
    %v1660 = vand.u32 2147483647, %v1653
    %vm1661 = vcmp.lt.f32.partialorder %v1660, 0.0004427343
    %v1662 = vsel %vm1661, %v1659, %v1656
    %v1663 = vadd.f32 %v1649, %v1662
    %v1664 = vadd.f32 %v1663, 1e-06
    %1665 = vst [vmem:[#allocation7] sm:$0x3] %v1664
    // Predicated region
    $region42: #{actor_cnn_forward.1} parent=1 // pred_check
      _
    $region43: #{actor_cnn_forward.1} parent=1 // pred_check_branch
      %1667 = sbr.rel (0) target = $region45
    $region44: #{actor_cnn_forward.1} parent=1 // pred_region
      %s1669 = ssub.s32 32, 32
      %1670 = vsyncadd [#allocation4], %s1669
      %s1672 = sshll.u32 [#allocation7], 4
      %s1673 = int_to_ptr.vmem [resolvable:$true] %s1672
      %1675 = dma.vmem_to_hbm [thread:$0]  %s1673, 32, %s8, [#allocation4]
    $region45: #{actor_cnn_forward.1} parent=1 // pred_fallthru
      _
    // Predicated region
    $region46: #{actor_cnn_forward.1} parent=1 // pred_check
      _
    $region47: #{actor_cnn_forward.1} parent=1 // pred_check_branch
      %1677 = sbr.rel (0) target = $region49
    $region48: #{actor_cnn_forward.1} parent=1 // pred_region
      %1678 = dma.done [#allocation4], 32
    $region49: #{actor_cnn_forward.1} parent=1 // pred_fallthru
      _
    %1679 = vsyncpa [#allocation3], 1
    %1680 = vsyncpa [#allocation6], 1
    %1681 = vsyncpa [#allocation4], 1

</llo_original>
